<compile_context>
chip_gen: v6e
topology: v6e:2x2x1
jax: 0.10.0
libtpu: 0.0.40
codegen_flags: <defaults>
</compile_context>

<pallas_src>
import jax
import jax.numpy as jnp
from jax.experimental import pallas as pl
from jax.experimental.pallas import tpu as pltpu


# ----------------------------------------------------------------------------
# Pallas kernel: fused matmul + bias + ReLU (the body of every BasicConv2d)
# ----------------------------------------------------------------------------
def _matmul_bias_relu_kernel(x_ref, w_ref, b_ref, o_ref):
    """o = relu(x @ w + b).

    x_ref: (TM, K)      bf16   (im2col slab tile, M = N*H*W rows)
    w_ref: (K, Cout)    bf16   (BN scale folded in)
    b_ref: (1, Cout)    f32    (BN shift)
    o_ref: (TM, Cout)   f32
    """
    acc = jnp.dot(x_ref[...], w_ref[...], preferred_element_type=jnp.float32)
    o_ref[...] = jnp.maximum(acc + b_ref[...], 0.0).astype(o_ref.dtype)


def matmul_bias_relu(x_cols, w, b, *, tm=128):
    """relu(x_cols @ w + b), M tiled on a 1-D 'parallel' grid."""
    M, K = x_cols.shape
    K2, Cout = w.shape
    assert K == K2, (K, K2)
    m_pad = pl.cdiv(M, tm) * tm
    if m_pad != M:
        x_cols = jnp.pad(x_cols, ((0, m_pad - M), (0, 0)))
    out = pl.pallas_call(
        _matmul_bias_relu_kernel,
        out_shape=jax.ShapeDtypeStruct((m_pad, Cout), jnp.float32),
        grid=(m_pad // tm,),
        in_specs=[
            pl.BlockSpec((tm, K), lambda i: (i, 0)),
            pl.BlockSpec((K, Cout), lambda i: (0, 0)),
            pl.BlockSpec((1, Cout), lambda i: (0, 0)),
        ],
        out_specs=pl.BlockSpec((tm, Cout), lambda i: (i, 0)),
        compiler_params=pltpu.CompilerParams(
            dimension_semantics=("parallel",)),
    )(x_cols.astype(jnp.bfloat16), w.astype(jnp.bfloat16),
      b.reshape(1, Cout).astype(jnp.float32))
    return out[:M] if m_pad != M else out


# ----------------------------------------------------------------------------
# Wrapper-side im2col (layout plumbing) + conv entry point
# ----------------------------------------------------------------------------
def _im2col(x_nhwc, kh, kw, ph, pw):
    """(N,H,W,C) -> (N*H*W, kh*kw*C) stride-1 zero-padded patches, tap-major."""
    N, H, W, C = x_nhwc.shape
    if kh == 1 and kw == 1:
        return x_nhwc.reshape(N * H * W, C)
    xp = jnp.pad(x_nhwc, ((0, 0), (ph, ph), (pw, pw), (0, 0)))
    taps = [xp[:, dy:dy + H, dx:dx + W, :]
            for dy in range(kh) for dx in range(kw)]
    return jnp.concatenate(taps, axis=-1).reshape(N * H * W, kh * kw * C)


def conv_bn_relu(x_nhwc, w_cols, bias, kh, kw, ph, pw):
    N, H, W, _ = x_nhwc.shape
    cout = w_cols.shape[1]
    y = matmul_bias_relu(_im2col(x_nhwc, kh, kw, ph, pw), w_cols, bias)
    return y.reshape(N, H, W, cout)


# ----------------------------------------------------------------------------
# Parameter construction (deterministic, BN folded into conv, bf16 weights)
# ----------------------------------------------------------------------------
def _init_basic_conv(key, cin, cout, kh, kw):
    kconv, kg, kb, km, kv = jax.random.split(key, 5)
    # PyTorch conv weight layout (Cout, Cin, kh, kw), bias=False.
    w = 0.05 * jax.random.normal(kconv, (cout, cin, kh, kw), jnp.float32)
    gamma = 1.0 + 0.1 * jax.random.normal(kg, (cout,), jnp.float32)
    beta = 0.1 * jax.random.normal(kb, (cout,), jnp.float32)
    running_mean = 0.1 * jax.random.normal(km, (cout,), jnp.float32)
    running_var = jax.random.uniform(kv, (cout,), jnp.float32, 0.5, 1.5)
    eps = 1e-3  # BatchNorm2d(eps=0.001) inside BasicConv2d
    scale = gamma / jnp.sqrt(running_var + eps)
    bias = beta - running_mean * scale
    w_folded = w * scale[:, None, None, None]
    # (Cout,Cin,kh,kw) -> (kh,kw,Cin,Cout) -> (kh*kw*Cin, Cout), tap-major,
    # matching _im2col's tap ordering.  Stored bf16 to feed the MXU directly.
    w_cols = jnp.transpose(w_folded, (2, 3, 1, 0)).reshape(kh * kw * cin, cout)
    return {"w": w_cols.astype(jnp.bfloat16), "b": bias}


def init_inception_c(key, in_channels, channels_7x7):
    c7 = channels_7x7
    k = jax.random.split(key, 10)
    b1x1 = _init_basic_conv(k[0], in_channels, 192, 1, 1)   # branch1x1
    b7_1 = _init_basic_conv(k[1], in_channels, c7, 1, 1)    # branch7x7_1
    bd_1 = _init_basic_conv(k[4], in_channels, c7, 1, 1)    # branch7x7dbl_1
    bpool = _init_basic_conv(k[9], in_channels, 192, 1, 1)  # branch_pool conv
    return {
        # Fused 1x1 "stem": the three 1x1 convs reading x, Cout = [192|c7|c7].
        "stem": {"w": jnp.concatenate([b1x1["w"], b7_1["w"], bd_1["w"]], axis=1),
                 "b": jnp.concatenate([b1x1["b"], b7_1["b"], bd_1["b"]], axis=0)},
        "branch7x7_2":    _init_basic_conv(k[2], c7, c7, 1, 7),
        "branch7x7_3":    _init_basic_conv(k[3], c7, 192, 7, 1),
        "branch7x7dbl_2": _init_basic_conv(k[5], c7, c7, 7, 1),
        "branch7x7dbl_3": _init_basic_conv(k[6], c7, c7, 1, 7),
        "branch7x7dbl_4": _init_basic_conv(k[7], c7, c7, 7, 1),
        "branch7x7dbl_5": _init_basic_conv(k[8], c7, 192, 1, 7),
        # avgpool3x3(stride1,pad1,count_include_pad=True) + 1x1 conv
        # == 3x3 conv whose every tap weight is W_1x1 / 9 (exact identity).
        "branch_pool": {
            "w": jnp.tile(bpool["w"].astype(jnp.float32) / 9.0,
                          (9, 1)).astype(jnp.bfloat16),
            "b": bpool["b"]},
    }


# ----------------------------------------------------------------------------
# Forward pass (kernel-sizes/paddings are static Python ints here)
# ----------------------------------------------------------------------------
def inception_c_forward(params, x_nchw):
    # NCHW (PyTorch) -> NHWC; bf16 activations feed the MXU, f32 accumulation.
    x = jnp.transpose(x_nchw, (0, 2, 3, 1)).astype(jnp.bfloat16)
    c7 = params["branch7x7_2"]["w"].shape[1]

    # Fused 1x1 stem: [branch1x1 | branch7x7_1 | branch7x7dbl_1].
    stem = conv_bn_relu(x, params["stem"]["w"], params["stem"]["b"], 1, 1, 0, 0)
    branch1x1 = stem[..., :192]
    b7 = stem[..., 192:192 + c7].astype(jnp.bfloat16)
    bd = stem[..., 192 + c7:].astype(jnp.bfloat16)

    # 7x7 branch: (1,7) then (7,1).
    p = params["branch7x7_2"]
    b7 = conv_bn_relu(b7, p["w"], p["b"], 1, 7, 0, 3).astype(jnp.bfloat16)
    p = params["branch7x7_3"]
    branch7x7 = conv_bn_relu(b7, p["w"], p["b"], 7, 1, 3, 0)

    # 7x7 double branch: (7,1),(1,7),(7,1),(1,7).
    p = params["branch7x7dbl_2"]
    bd = conv_bn_relu(bd, p["w"], p["b"], 7, 1, 3, 0).astype(jnp.bfloat16)
    p = params["branch7x7dbl_3"]
    bd = conv_bn_relu(bd, p["w"], p["b"], 1, 7, 0, 3).astype(jnp.bfloat16)
    p = params["branch7x7dbl_4"]
    bd = conv_bn_relu(bd, p["w"], p["b"], 7, 1, 3, 0).astype(jnp.bfloat16)
    p = params["branch7x7dbl_5"]
    branch7x7dbl = conv_bn_relu(bd, p["w"], p["b"], 1, 7, 0, 3)

    # Pool branch: avgpool3x3 + 1x1 conv fused into one 3x3 conv kernel.
    p = params["branch_pool"]
    branch_pool = conv_bn_relu(x, p["w"], p["b"], 3, 3, 1, 1)

    out = jnp.concatenate(
        [branch1x1, branch7x7, branch7x7dbl, branch_pool], axis=-1)
    # NHWC -> NCHW to match the PyTorch module's output convention.
    return jnp.transpose(out, (0, 3, 1, 2))


# ----------------------------------------------------------------------------
# Pure-JAX f32 reference (for tolerance validation of the bf16-MXU kernels)
# ----------------------------------------------------------------------------
def _ref_conv(x_nhwc, w_cols, b, kh, kw, ph, pw):
    cin = w_cols.shape[0] // (kh * kw)
    cout = w_cols.shape[1]
    w = w_cols.astype(jnp.float32).reshape(kh, kw, cin, cout)  # HWIO
    y = jax.lax.conv_general_dilated(
        x_nhwc.astype(jnp.float32), w, window_strides=(1, 1),
        padding=((ph, ph), (pw, pw)),
        dimension_numbers=("NHWC", "HWIO", "NHWC"),
        precision=jax.lax.Precision.HIGHEST)
    return jnp.maximum(y + b.astype(jnp.float32), 0.0)


def inception_c_reference(params, x_nchw):
    x = jnp.transpose(x_nchw, (0, 2, 3, 1)).astype(jnp.float32)
    c7 = params["branch7x7_2"]["w"].shape[1]
    stem = _ref_conv(x, params["stem"]["w"], params["stem"]["b"], 1, 1, 0, 0)
    branch1x1 = stem[..., :192]
    b7 = stem[..., 192:192 + c7]
    bd = stem[..., 192 + c7:]
    p = params["branch7x7_2"]; b7 = _ref_conv(b7, p["w"], p["b"], 1, 7, 0, 3)
    p = params["branch7x7_3"]; branch7x7 = _ref_conv(b7, p["w"], p["b"], 7, 1, 3, 0)
    p = params["branch7x7dbl_2"]; bd = _ref_conv(bd, p["w"], p["b"], 7, 1, 3, 0)
    p = params["branch7x7dbl_3"]; bd = _ref_conv(bd, p["w"], p["b"], 1, 7, 0, 3)
    p = params["branch7x7dbl_4"]; bd = _ref_conv(bd, p["w"], p["b"], 7, 1, 3, 0)
    p = params["branch7x7dbl_5"]; branch7x7dbl = _ref_conv(bd, p["w"], p["b"], 1, 7, 0, 3)
    p = params["branch_pool"]; branch_pool = _ref_conv(x, p["w"], p["b"], 3, 3, 1, 1)
    out = jnp.concatenate(
        [branch1x1, branch7x7, branch7x7dbl, branch_pool], axis=-1)
    return jnp.transpose(out, (0, 3, 1, 2))


# ----------------------------------------------------------------------------
if __name__ == "__main__":
    key = jax.random.PRNGKey(0)
    k_params, k_x = jax.random.split(key)

    # Small shapes consistent with InceptionC (real: in=768, c7=128..192, 17x17).
    N, C_IN, H, W, C7 = 2, 64, 8, 8, 32
    params = init_inception_c(k_params, C_IN, C7)
    x = jax.random.normal(k_x, (N, C_IN, H, W), jnp.float32)

    y = jax.jit(inception_c_forward)(params, x)
    y = jax.block_until_ready(y)

    expected = (N, 192 * 4, H, W)  # (2, 768, 8, 8)
    assert y.shape == expected, (y.shape, expected)
    assert bool(jnp.all(jnp.isfinite(y))), "output must be finite"
    assert bool(jnp.all(y >= 0.0)), "ReLU output must be non-negative"

    # Tolerance check vs pure-JAX f32 reference (kernel uses bf16 MXU operands
    # with f32 accumulation, so a small relative error is expected).
    y_ref = jax.block_until_ready(jax.jit(inception_c_reference)(params, x))
    scaled_err = jnp.max(jnp.abs(y - y_ref) / jnp.maximum(jnp.abs(y_ref), 1.0))
    assert float(scaled_err) < 0.1, f"max scaled error {float(scaled_err)}"

    print("KERNEL_OK")
</pallas_src>

<mosaic_0001>
module attributes {stable_mosaic.version = 11 : i64} {
  func.func @_matmul_bias_relu_kernel(%arg0: i32, %arg1: memref<128x576xbf16, #tpu.memory_space<vmem>>, %arg2: memref<576x192xbf16, #tpu.memory_space<vmem>>, %arg3: memref<1x192xf32, #tpu.memory_space<vmem>>, %arg4: memref<128x192xf32, #tpu.memory_space<vmem>>) attributes {dimension_semantics = [#tpu.dimension_semantics<parallel>], iteration_bounds = array<i64: 1>, scalar_prefetch = 0 : i64, scratch_operands = 0 : i64, tpu.core_type = #tpu.core_type<tc>, window_params = [{transform_indices = @transform_0, window_bounds = array<i64: 128, 576>}, {pipeline_mode = #tpu.pipeline_mode<synchronous>, transform_indices = @transform_1, window_bounds = array<i64: 576, 192>}, {pipeline_mode = #tpu.pipeline_mode<synchronous>, transform_indices = @transform_2, window_bounds = array<i64: 1, 192>}, {transform_indices = @transform_3, window_bounds = array<i64: 128, 192>}]} {
    %c0 = arith.constant 0 : index
    %c0_0 = arith.constant 0 : index
    %0 = vector.load %arg1[%c0, %c0_0] : memref<128x576xbf16, #tpu.memory_space<vmem>>, vector<128x576xbf16>
    %c0_1 = arith.constant 0 : index
    %c0_2 = arith.constant 0 : index
    %1 = vector.load %arg2[%c0_1, %c0_2] : memref<576x192xbf16, #tpu.memory_space<vmem>>, vector<576x192xbf16>
    %cst = arith.constant dense<0.000000e+00> : vector<128x192xf32>
    %2 = tpu.matmul %0, %1, %cst {dimension_numbers = #tpu.dot_dimension_numbers<[1], [0], [0], [1], [0, 0, 1, 1], [], []>} : vector<128x576xbf16>, vector<576x192xbf16>, vector<128x192xf32> -> vector<128x192xf32>
    %c0_3 = arith.constant 0 : index
    %c0_4 = arith.constant 0 : index
    %3 = vector.load %arg3[%c0_3, %c0_4] : memref<1x192xf32, #tpu.memory_space<vmem>>, vector<1x192xf32>
    %4 = vector.broadcast %3 : vector<1x192xf32> to vector<128x192xf32>
    %5 = arith.addf %2, %4 : vector<128x192xf32>
    %cst_5 = arith.constant 0.000000e+00 : f32
    %6 = vector.broadcast %cst_5 : f32 to vector<128x192xf32>
    %7 = arith.maximumf %5, %6 : vector<128x192xf32>
    %c0_6 = arith.constant 0 : index
    %c0_7 = arith.constant 0 : index
    %8 = vector.load %arg4[%c0_6, %c0_7] : memref<128x192xf32, #tpu.memory_space<vmem>>, vector<128x192xf32>
    tpu.vector_store %arg4[%c0_6, %c0_7], %7 {strides = array<i32>} : memref<128x192xf32, #tpu.memory_space<vmem>>, vector<128x192xf32>,
    return
  }
  func.func @transform_0(%arg0: i32) -> (i32, i32) {
    %c0_i32 = arith.constant 0 : i32
    %c0_i32_0 = arith.constant 0 : i32
    return %arg0, %c0_i32 : i32, i32
  }
  func.func @transform_1(%arg0: i32) -> (i32, i32) {
    %c0_i32 = arith.constant 0 : i32
    %c0_i32_0 = arith.constant 0 : i32
    %c0_i32_1 = arith.constant 0 : i32
    return %c0_i32, %c0_i32_0 : i32, i32
  }
  func.func @transform_2(%arg0: i32) -> (i32, i32) {
    %c0_i32 = arith.constant 0 : i32
    %c0_i32_0 = arith.constant 0 : i32
    %c0_i32_1 = arith.constant 0 : i32
    return %c0_i32, %c0_i32_0 : i32, i32
  }
  func.func @transform_3(%arg0: i32) -> (i32, i32) {
    %c0_i32 = arith.constant 0 : i32
    %c0_i32_0 = arith.constant 0 : i32
    return %arg0, %c0_i32 : i32, i32
  }
}

module attributes {stable_mosaic.version = 11 : i64} {
  func.func @_matmul_bias_relu_kernel(%arg0: i32, %arg1: memref<128x64xbf16, #tpu.memory_space<vmem>>, %arg2: memref<64x256xbf16, #tpu.memory_space<vmem>>, %arg3: memref<1x256xf32, #tpu.memory_space<vmem>>, %arg4: memref<128x256xf32, #tpu.memory_space<vmem>>) attributes {dimension_semantics = [#tpu.dimension_semantics<parallel>], iteration_bounds = array<i64: 1>, scalar_prefetch = 0 : i64, scratch_operands = 0 : i64, tpu.core_type = #tpu.core_type<tc>, window_params = [{transform_indices = @transform_0, window_bounds = array<i64: 128, 64>}, {pipeline_mode = #tpu.pipeline_mode<synchronous>, transform_indices = @transform_1, window_bounds = array<i64: 64, 256>}, {pipeline_mode = #tpu.pipeline_mode<synchronous>, transform_indices = @transform_2, window_bounds = array<i64: 1, 256>}, {transform_indices = @transform_3, window_bounds = array<i64: 128, 256>}]} {
    %c0 = arith.constant 0 : index
    %c0_0 = arith.constant 0 : index
    %0 = vector.load %arg1[%c0, %c0_0] : memref<128x64xbf16, #tpu.memory_space<vmem>>, vector<128x64xbf16>
    %c0_1 = arith.constant 0 : index
    %c0_2 = arith.constant 0 : index
    %1 = vector.load %arg2[%c0_1, %c0_2] : memref<64x256xbf16, #tpu.memory_space<vmem>>, vector<64x256xbf16>
    %cst = arith.constant dense<0.000000e+00> : vector<128x256xf32>
    %2 = tpu.matmul %0, %1, %cst {dimension_numbers = #tpu.dot_dimension_numbers<[1], [0], [0], [1], [0, 0, 1, 1], [], []>} : vector<128x64xbf16>, vector<64x256xbf16>, vector<128x256xf32> -> vector<128x256xf32>
    %c0_3 = arith.constant 0 : index
    %c0_4 = arith.constant 0 : index
    %3 = vector.load %arg3[%c0_3, %c0_4] : memref<1x256xf32, #tpu.memory_space<vmem>>, vector<1x256xf32>
    %4 = vector.broadcast %3 : vector<1x256xf32> to vector<128x256xf32>
    %5 = arith.addf %2, %4 : vector<128x256xf32>
    %cst_5 = arith.constant 0.000000e+00 : f32
    %6 = vector.broadcast %cst_5 : f32 to vector<128x256xf32>
    %7 = arith.maximumf %5, %6 : vector<128x256xf32>
    %c0_6 = arith.constant 0 : index
    %c0_7 = arith.constant 0 : index
    %8 = vector.load %arg4[%c0_6, %c0_7] : memref<128x256xf32, #tpu.memory_space<vmem>>, vector<128x256xf32>
    tpu.vector_store %arg4[%c0_6, %c0_7], %7 {strides = array<i32>} : memref<128x256xf32, #tpu.memory_space<vmem>>, vector<128x256xf32>,
    return
  }
  func.func @transform_0(%arg0: i32) -> (i32, i32) {
    %c0_i32 = arith.constant 0 : i32
    %c0_i32_0 = arith.constant 0 : i32
    return %arg0, %c0_i32 : i32, i32
  }
  func.func @transform_1(%arg0: i32) -> (i32, i32) {
    %c0_i32 = arith.constant 0 : i32
    %c0_i32_0 = arith.constant 0 : i32
    %c0_i32_1 = arith.constant 0 : i32
    return %c0_i32, %c0_i32_0 : i32, i32
  }
  func.func @transform_2(%arg0: i32) -> (i32, i32) {
    %c0_i32 = arith.constant 0 : i32
    %c0_i32_0 = arith.constant 0 : i32
    %c0_i32_1 = arith.constant 0 : i32
    return %c0_i32, %c0_i32_0 : i32, i32
  }
  func.func @transform_3(%arg0: i32) -> (i32, i32) {
    %c0_i32 = arith.constant 0 : i32
    %c0_i32_0 = arith.constant 0 : i32
    return %arg0, %c0_i32 : i32, i32
  }
}

module attributes {stable_mosaic.version = 11 : i64} {
  func.func @_matmul_bias_relu_kernel(%arg0: i32, %arg1: memref<128x224xbf16, #tpu.memory_space<vmem>>, %arg2: memref<224x32xbf16, #tpu.memory_space<vmem>>, %arg3: memref<1x32xf32, #tpu.memory_space<vmem>>, %arg4: memref<128x32xf32, #tpu.memory_space<vmem>>) attributes {dimension_semantics = [#tpu.dimension_semantics<parallel>], iteration_bounds = array<i64: 1>, scalar_prefetch = 0 : i64, scratch_operands = 0 : i64, tpu.core_type = #tpu.core_type<tc>, window_params = [{transform_indices = @transform_0, window_bounds = array<i64: 128, 224>}, {pipeline_mode = #tpu.pipeline_mode<synchronous>, transform_indices = @transform_1, window_bounds = array<i64: 224, 32>}, {pipeline_mode = #tpu.pipeline_mode<synchronous>, transform_indices = @transform_2, window_bounds = array<i64: 1, 32>}, {transform_indices = @transform_3, window_bounds = array<i64: 128, 32>}]} {
    %c0 = arith.constant 0 : index
    %c0_0 = arith.constant 0 : index
    %0 = vector.load %arg1[%c0, %c0_0] : memref<128x224xbf16, #tpu.memory_space<vmem>>, vector<128x224xbf16>
    %c0_1 = arith.constant 0 : index
    %c0_2 = arith.constant 0 : index
    %1 = vector.load %arg2[%c0_1, %c0_2] : memref<224x32xbf16, #tpu.memory_space<vmem>>, vector<224x32xbf16>
    %cst = arith.constant dense<0.000000e+00> : vector<128x32xf32>
    %2 = tpu.matmul %0, %1, %cst {dimension_numbers = #tpu.dot_dimension_numbers<[1], [0], [0], [1], [0, 0, 1, 1], [], []>} : vector<128x224xbf16>, vector<224x32xbf16>, vector<128x32xf32> -> vector<128x32xf32>
    %c0_3 = arith.constant 0 : index
    %c0_4 = arith.constant 0 : index
    %3 = vector.load %arg3[%c0_3, %c0_4] : memref<1x32xf32, #tpu.memory_space<vmem>>, vector<1x32xf32>
    %4 = vector.broadcast %3 : vector<1x32xf32> to vector<128x32xf32>
    %5 = arith.addf %2, %4 : vector<128x32xf32>
    %cst_5 = arith.constant 0.000000e+00 : f32
    %6 = vector.broadcast %cst_5 : f32 to vector<128x32xf32>
    %7 = arith.maximumf %5, %6 : vector<128x32xf32>
    %c0_6 = arith.constant 0 : index
    %c0_7 = arith.constant 0 : index
    %8 = vector.load %arg4[%c0_6, %c0_7] : memref<128x32xf32, #tpu.memory_space<vmem>>, vector<128x32xf32>
    tpu.vector_store %arg4[%c0_6, %c0_7], %7 {strides = array<i32>} : memref<128x32xf32, #tpu.memory_space<vmem>>, vector<128x32xf32>,
    return
  }
  func.func @transform_0(%arg0: i32) -> (i32, i32) {
    %c0_i32 = arith.constant 0 : i32
    %c0_i32_0 = arith.constant 0 : i32
    return %arg0, %c0_i32 : i32, i32
  }
  func.func @transform_1(%arg0: i32) -> (i32, i32) {
    %c0_i32 = arith.constant 0 : i32
    %c0_i32_0 = arith.constant 0 : i32
    %c0_i32_1 = arith.constant 0 : i32
    return %c0_i32, %c0_i32_0 : i32, i32
  }
  func.func @transform_2(%arg0: i32) -> (i32, i32) {
    %c0_i32 = arith.constant 0 : i32
    %c0_i32_0 = arith.constant 0 : i32
    %c0_i32_1 = arith.constant 0 : i32
    return %c0_i32, %c0_i32_0 : i32, i32
  }
  func.func @transform_3(%arg0: i32) -> (i32, i32) {
    %c0_i32 = arith.constant 0 : i32
    %c0_i32_0 = arith.constant 0 : i32
    return %arg0, %c0_i32 : i32, i32
  }
}

module attributes {stable_mosaic.version = 11 : i64} {
  func.func @_matmul_bias_relu_kernel(%arg0: i32, %arg1: memref<128x224xbf16, #tpu.memory_space<vmem>>, %arg2: memref<224x192xbf16, #tpu.memory_space<vmem>>, %arg3: memref<1x192xf32, #tpu.memory_space<vmem>>, %arg4: memref<128x192xf32, #tpu.memory_space<vmem>>) attributes {dimension_semantics = [#tpu.dimension_semantics<parallel>], iteration_bounds = array<i64: 1>, scalar_prefetch = 0 : i64, scratch_operands = 0 : i64, tpu.core_type = #tpu.core_type<tc>, window_params = [{transform_indices = @transform_0, window_bounds = array<i64: 128, 224>}, {pipeline_mode = #tpu.pipeline_mode<synchronous>, transform_indices = @transform_1, window_bounds = array<i64: 224, 192>}, {pipeline_mode = #tpu.pipeline_mode<synchronous>, transform_indices = @transform_2, window_bounds = array<i64: 1, 192>}, {transform_indices = @transform_3, window_bounds = array<i64: 128, 192>}]} {
    %c0 = arith.constant 0 : index
    %c0_0 = arith.constant 0 : index
    %0 = vector.load %arg1[%c0, %c0_0] : memref<128x224xbf16, #tpu.memory_space<vmem>>, vector<128x224xbf16>
    %c0_1 = arith.constant 0 : index
    %c0_2 = arith.constant 0 : index
    %1 = vector.load %arg2[%c0_1, %c0_2] : memref<224x192xbf16, #tpu.memory_space<vmem>>, vector<224x192xbf16>
    %cst = arith.constant dense<0.000000e+00> : vector<128x192xf32>
    %2 = tpu.matmul %0, %1, %cst {dimension_numbers = #tpu.dot_dimension_numbers<[1], [0], [0], [1], [0, 0, 1, 1], [], []>} : vector<128x224xbf16>, vector<224x192xbf16>, vector<128x192xf32> -> vector<128x192xf32>
    %c0_3 = arith.constant 0 : index
    %c0_4 = arith.constant 0 : index
    %3 = vector.load %arg3[%c0_3, %c0_4] : memref<1x192xf32, #tpu.memory_space<vmem>>, vector<1x192xf32>
    %4 = vector.broadcast %3 : vector<1x192xf32> to vector<128x192xf32>
    %5 = arith.addf %2, %4 : vector<128x192xf32>
    %cst_5 = arith.constant 0.000000e+00 : f32
    %6 = vector.broadcast %cst_5 : f32 to vector<128x192xf32>
    %7 = arith.maximumf %5, %6 : vector<128x192xf32>
    %c0_6 = arith.constant 0 : index
    %c0_7 = arith.constant 0 : index
    %8 = vector.load %arg4[%c0_6, %c0_7] : memref<128x192xf32, #tpu.memory_space<vmem>>, vector<128x192xf32>
    tpu.vector_store %arg4[%c0_6, %c0_7], %7 {strides = array<i32>} : memref<128x192xf32, #tpu.memory_space<vmem>>, vector<128x192xf32>,
    return
  }
  func.func @transform_0(%arg0: i32) -> (i32, i32) {
    %c0_i32 = arith.constant 0 : i32
    %c0_i32_0 = arith.constant 0 : i32
    return %arg0, %c0_i32 : i32, i32
  }
  func.func @transform_1(%arg0: i32) -> (i32, i32) {
    %c0_i32 = arith.constant 0 : i32
    %c0_i32_0 = arith.constant 0 : i32
    %c0_i32_1 = arith.constant 0 : i32
    return %c0_i32, %c0_i32_0 : i32, i32
  }
  func.func @transform_2(%arg0: i32) -> (i32, i32) {
    %c0_i32 = arith.constant 0 : i32
    %c0_i32_0 = arith.constant 0 : i32
    %c0_i32_1 = arith.constant 0 : i32
    return %c0_i32, %c0_i32_0 : i32, i32
  }
  func.func @transform_3(%arg0: i32) -> (i32, i32) {
    %c0_i32 = arith.constant 0 : i32
    %c0_i32_0 = arith.constant 0 : i32
    return %arg0, %c0_i32 : i32, i32
  }
}

</mosaic_0001>

<llo_original>
// kernel: inception_c_forward.8
$region0: #{inception_c_forward.8}
  #allocation0 [shape = 'u32[]', space=smem, size = 0x4, offset = 0x4, fixed_abs, tag = 'smem constant byte address 0x4 - core index']
  #allocation1 [shape = 'u32[144,128]{1,0:T(1,128)}', space=vmem, size = 0x12000, scoped, tag = 'internal scratch']
  %s0 = inlined_call_operand.vmem [shape: bf16[128,64], index: 0, kind: input, shape index: {}]
  %s1 = inlined_call_operand.vmem [shape: bf16[64,256], index: 1, kind: input, shape index: {}]
  %s2 = inlined_call_operand.vmem [shape: f32[1,256], index: 2, kind: input, shape index: {}]
  %s3 = inlined_call_operand.vmem [shape: f32[128,256], index: 3, kind: output, shape index: {}]
  %s4 = sld [smem:[#allocation0]]
  $region22: #{inception_c_forward.8} parent=0
    _
  %s6 = ssub.s32 1, %s4
  %s7 = scalar_select 0, %s6, %s4
  // Predicated region
  $region2: #{inception_c_forward.8} parent=0 // pred_check
    _
  $region3: #{inception_c_forward.8} parent=0 // pred_check_branch
    %9 = sbr.rel (0) target = $region5
  $region4: #{inception_c_forward.8} parent=0 // pred_region
    _
  $region5: #{inception_c_forward.8} parent=0 // pred_fallthru
    _
  // Predicated region
  $region6: #{inception_c_forward.8} parent=0 // pred_check
    _
  $region7: #{inception_c_forward.8} parent=0 // pred_check_branch
    %11 = sbr.rel (0) target = $region9
  $region8: #{inception_c_forward.8} parent=0 // pred_region
    _
  $region9: #{inception_c_forward.8} parent=0 // pred_fallthru
    _
  // Predicated region
  $region10: #{inception_c_forward.8} parent=0 // pred_check
    _
  $region11: #{inception_c_forward.8} parent=0 // pred_check_branch
    %13 = sbr.rel (0) target = $region13
  $region12: #{inception_c_forward.8} parent=0 // pred_region
    _
  $region13: #{inception_c_forward.8} parent=0 // pred_fallthru
    _
  %v15 = vld [vmem:[%s0] sm:$0xf]
  %v16 = vld [vmem:[%s0 + $0x4] sm:$0xf]
  %v17 = vld [vmem:[%s0 + $0x8] sm:$0xf]
  %v18 = vld [vmem:[%s0 + $0xc] sm:$0xf]
  %v19 = vld [vmem:[%s0 + $0x10] sm:$0xf]
  %v20 = vld [vmem:[%s0 + $0x14] sm:$0xf]
  %v21 = vld [vmem:[%s0 + $0x18] sm:$0xf]
  %v22 = vld [vmem:[%s0 + $0x1c] sm:$0xf]
  %v23 = vld [vmem:[%s0 + $0x20] sm:$0xf]
  %v24 = vld [vmem:[%s0 + $0x24] sm:$0xf]
  %v25 = vld [vmem:[%s0 + $0x28] sm:$0xf]
  %v26 = vld [vmem:[%s0 + $0x2c] sm:$0xf]
  %v27 = vld [vmem:[%s0 + $0x30] sm:$0xf]
  %v28 = vld [vmem:[%s0 + $0x34] sm:$0xf]
  %v29 = vld [vmem:[%s0 + $0x38] sm:$0xf]
  %v30 = vld [vmem:[%s0 + $0x3c] sm:$0xf]
  %v31 = vld [vmem:[%s1] sm:$0xff]
  %v32 = vld [vmem:[%s1 + $0x8] sm:$0xff]
  %v33 = vld [vmem:[%s1 + $0x10] sm:$0xff]
  %v34 = vld [vmem:[%s1 + $0x18] sm:$0xff]
  %v35 = vld [vmem:[%s1 + $0x20] sm:$0xff]
  %v36 = vld [vmem:[%s1 + $0x28] sm:$0xff]
  %v37 = vld [vmem:[%s1 + $0x30] sm:$0xff]
  %v38 = vld [vmem:[%s1 + $0x38] sm:$0xff]
  %v39 = vld [vmem:[%s2] sm:$0x3]
  %v41 = vlaneseq
  %v42 = vshrl.u32 %v41, 7
  %v43 = vsub.s32 0, %v42
  %v44 = vrot.slane %v39, %v43
  %v45 = vlaneseq
  %v46 = vshrl.u32 %v45, 7
  %v47 = vsub.s32 1, %v46
  %v48 = vrot.slane %v39, %v47
  %v67 = vunpack.c.l.b16 %v15
  %v68 = vunpack.c.l.b16 %v16
  %v69 = vunpack.c.l.b16 %v17
  %v70 = vunpack.c.l.b16 %v18
  %v71 = vunpack.c.l.b16 %v19
  %v72 = vunpack.c.l.b16 %v20
  %v73 = vunpack.c.l.b16 %v21
  %v74 = vunpack.c.l.b16 %v22
  %v75 = vunpack.c.l.b16 %v23
  %v76 = vunpack.c.l.b16 %v24
  %v77 = vunpack.c.l.b16 %v25
  %v78 = vunpack.c.l.b16 %v26
  %v79 = vunpack.c.l.b16 %v27
  %v80 = vunpack.c.l.b16 %v28
  %v81 = vunpack.c.l.b16 %v29
  %v82 = vunpack.c.l.b16 %v30
  %v83 = vpack.c.b16 %v68, %v67
  %v84 = vpack.c.b16 %v70, %v69
  %v85 = vpack.c.b16 %v72, %v71
  %v86 = vpack.c.b16 %v74, %v73
  %v87 = vpack.c.b16 %v76, %v75
  %v88 = vpack.c.b16 %v78, %v77
  %v89 = vpack.c.b16 %v80, %v79
  %v90 = vpack.c.b16 %v82, %v81
  %v99 = vunpack.c.l.b16 %v31
  %v100 = vunpack.c.h.b16 %v31
  %v101 = vunpack.c.l.b16 %v32
  %v102 = vunpack.c.h.b16 %v32
  %v103 = vunpack.c.l.b16 %v33
  %v104 = vunpack.c.h.b16 %v33
  %v105 = vunpack.c.l.b16 %v34
  %v106 = vunpack.c.h.b16 %v34
  %v107 = vunpack.c.l.b16 %v35
  %v108 = vunpack.c.h.b16 %v35
  %v109 = vunpack.c.l.b16 %v36
  %v110 = vunpack.c.h.b16 %v36
  %v111 = vunpack.c.l.b16 %v37
  %v112 = vunpack.c.h.b16 %v37
  %v113 = vunpack.c.l.b16 %v38
  %v114 = vunpack.c.h.b16 %v38
  %v115 = vpack.c.b16 %v101, %v99
  %v116 = vpack.c.b16 %v102, %v100
  %v117 = vpack.c.b16 %v105, %v103
  %v118 = vpack.c.b16 %v106, %v104
  %v119 = vpack.c.b16 %v109, %v107
  %v120 = vpack.c.b16 %v110, %v108
  %v121 = vpack.c.b16 %v113, %v111
  %v122 = vpack.c.b16 %v114, %v112
  %vm131 = vcmask 523264
  %v133 = vsel %vm131, %v83, 0
  %v136 = vsel %vm131, %v84, 0
  %v139 = vsel %vm131, %v85, 0
  %v142 = vsel %vm131, %v86, 0
  %v145 = vsel %vm131, %v87, 0
  %v148 = vsel %vm131, %v88, 0
  %v151 = vsel %vm131, %v89, 0
  %v154 = vsel %vm131, %v90, 0
  %156 = vmatprep.subr.bf16.mxu0 0
  %157 = vmatpush1.bf16.msra.mxu0 0
  %158 = vmatprep.subr.bf16.mxu0 0
  %159 = vmatpush1.bf16.msra.mxu0 0
  %160 = vmatprep.subr.bf16.mxu0 0
  %161 = vmatpush1.bf16.msra.mxu0 0
  %162 = vmatprep.subr.bf16.mxu0 0
  %163 = vmatpush1.bf16.msra.mxu0 0
  %164 = vmatprep.subr.bf16.mxu0 %v122
  %165 = vmatpush1.bf16.msra.mxu0 %v121
  %166 = vmatprep.subr.bf16.mxu0 %v120
  %167 = vmatpush1.bf16.msra.mxu0 %v119
  %168 = vmatprep.subr.bf16.mxu0 %v118
  %169 = vmatpush1.bf16.msra.mxu0 %v117
  %170 = vmatprep.subr.bf16.mxu0 %v116
  %171 = vmatpush1.bf16.msra.mxu0 %v115
  %172 = vmatprep.subr.bf16.mxu0 0
  %173 = vmatpush2.bf16.msra.mxu0 0
  %174 = vmatprep.subr.bf16.mxu0 0
  %175 = vmatpush2.bf16.msra.mxu0 0
  %176 = vmatprep.subr.bf16.mxu0 0
  %177 = vmatpush2.bf16.msra.mxu0 0
  %178 = vmatprep.subr.bf16.mxu0 0
  %179 = vmatpush2.bf16.msra.mxu0 0
  %180 = vmatprep.subr.bf16.mxu0 0
  %181 = vmatpush2.bf16.msra.mxu0 0
  %182 = vmatprep.subr.bf16.mxu0 0
  %183 = vmatpush2.bf16.msra.mxu0 0
  %184 = vmatprep.subr.bf16.mxu0 0
  %185 = vmatpush2.bf16.msra.mxu0 0
  %186 = vmatprep.subr.bf16.mxu0 0
  %187 = vmatpush2.bf16.msra.mxu0 0
  %188 = vmatprep.mubr.bf16.mxu0 0
  %189 = vmatmul.mubr.bf16.gmra.mxu0 %v133
  %v190 = vpop.f32.mrf.mxu0
  %v191 = vadd.f32 %v44, %v190
  %v192 = vpop.f32.mrf.mxu0
  %v193 = vadd.f32 %v48, %v192
  %v194 = vpop.f32.mrf.mxu0
  %v195 = vadd.f32 %v44, %v194
  %v196 = vpop.f32.mrf.mxu0
  %v197 = vadd.f32 %v48, %v196
  %198 = vmatprep.mubr.bf16.mxu0 0
  %199 = vmatmul.mubr.bf16.gmra.mxu0 %v136
  %v200 = vpop.f32.mrf.mxu0
  %v201 = vadd.f32 %v44, %v200
  %v202 = vpop.f32.mrf.mxu0
  %v203 = vadd.f32 %v48, %v202
  %v204 = vpop.f32.mrf.mxu0
  %v205 = vadd.f32 %v44, %v204
  %v206 = vpop.f32.mrf.mxu0
  %v207 = vadd.f32 %v48, %v206
  %208 = vmatprep.mubr.bf16.mxu0 0
  %209 = vmatmul.mubr.bf16.gmra.mxu0 %v139
  %v210 = vpop.f32.mrf.mxu0
  %v211 = vadd.f32 %v44, %v210
  %v212 = vpop.f32.mrf.mxu0
  %v213 = vadd.f32 %v48, %v212
  %v214 = vpop.f32.mrf.mxu0
  %v215 = vadd.f32 %v44, %v214
  %v216 = vpop.f32.mrf.mxu0
  %v217 = vadd.f32 %v48, %v216
  %218 = vmatprep.mubr.bf16.mxu0 0
  %219 = vmatmul.mubr.bf16.gmra.mxu0 %v142
  %v220 = vpop.f32.mrf.mxu0
  %v221 = vadd.f32 %v44, %v220
  %v222 = vpop.f32.mrf.mxu0
  %v223 = vadd.f32 %v48, %v222
  %v224 = vpop.f32.mrf.mxu0
  %v225 = vadd.f32 %v44, %v224
  %v226 = vpop.f32.mrf.mxu0
  %v227 = vadd.f32 %v48, %v226
  %228 = vmatprep.mubr.bf16.mxu0 0
  %229 = vmatmul.mubr.bf16.gmra.mxu0 %v145
  %v230 = vpop.f32.mrf.mxu0
  %v231 = vadd.f32 %v44, %v230
  %v232 = vpop.f32.mrf.mxu0
  %v233 = vadd.f32 %v48, %v232
  %v234 = vpop.f32.mrf.mxu0
  %v235 = vadd.f32 %v44, %v234
  %v236 = vpop.f32.mrf.mxu0
  %v237 = vadd.f32 %v48, %v236
  %238 = vmatprep.mubr.bf16.mxu0 0
  %239 = vmatmul.mubr.bf16.gmra.mxu0 %v148
  %v240 = vpop.f32.mrf.mxu0
  %v241 = vadd.f32 %v44, %v240
  %v242 = vpop.f32.mrf.mxu0
  %v243 = vadd.f32 %v48, %v242
  %v244 = vpop.f32.mrf.mxu0
  %v245 = vadd.f32 %v44, %v244
  %v246 = vpop.f32.mrf.mxu0
  %v247 = vadd.f32 %v48, %v246
  %248 = vmatprep.mubr.bf16.mxu0 0
  %249 = vmatmul.mubr.bf16.gmra.mxu0 %v151
  %v250 = vpop.f32.mrf.mxu0
  %v251 = vadd.f32 %v44, %v250
  %v252 = vpop.f32.mrf.mxu0
  %v253 = vadd.f32 %v48, %v252
  %v254 = vpop.f32.mrf.mxu0
  %v255 = vadd.f32 %v44, %v254
  %v256 = vpop.f32.mrf.mxu0
  %v257 = vadd.f32 %v48, %v256
  %258 = vmatprep.mubr.bf16.mxu0 0
  %259 = vmatmul.mubr.bf16.gmra.mxu0 %v154
  %v260 = vpop.f32.mrf.mxu0
  %v261 = vadd.f32 %v44, %v260
  %v262 = vpop.f32.mrf.mxu0
  %v263 = vadd.f32 %v48, %v262
  %v264 = vpop.f32.mrf.mxu0
  %v265 = vadd.f32 %v44, %v264
  %v266 = vpop.f32.mrf.mxu0
  %v267 = vadd.f32 %v48, %v266
  %268 = vdwg.mxu0
  %v269 = vmax.f32 %v191, 0.0
  %v270 = vmax.f32 %v193, 0.0
  %v271 = vmax.f32 %v195, 0.0
  %v272 = vmax.f32 %v197, 0.0
  %v273 = vmax.f32 %v201, 0.0
  %v274 = vmax.f32 %v203, 0.0
  %v275 = vmax.f32 %v205, 0.0
  %v276 = vmax.f32 %v207, 0.0
  %v277 = vmax.f32 %v211, 0.0
  %v278 = vmax.f32 %v213, 0.0
  %v279 = vmax.f32 %v215, 0.0
  %v280 = vmax.f32 %v217, 0.0
  %v281 = vmax.f32 %v221, 0.0
  %v282 = vmax.f32 %v223, 0.0
  %v283 = vmax.f32 %v225, 0.0
  %v284 = vmax.f32 %v227, 0.0
  %v285 = vmax.f32 %v231, 0.0
  %v286 = vmax.f32 %v233, 0.0
  %v287 = vmax.f32 %v235, 0.0
  %v288 = vmax.f32 %v237, 0.0
  %v289 = vmax.f32 %v241, 0.0
  %v290 = vmax.f32 %v243, 0.0
  %v291 = vmax.f32 %v245, 0.0
  %v292 = vmax.f32 %v247, 0.0
  %v293 = vmax.f32 %v251, 0.0
  %v294 = vmax.f32 %v253, 0.0
  %v295 = vmax.f32 %v255, 0.0
  %v296 = vmax.f32 %v257, 0.0
  %v297 = vmax.f32 %v261, 0.0
  %v298 = vmax.f32 %v263, 0.0
  %v299 = vmax.f32 %v265, 0.0
  %v300 = vmax.f32 %v267, 0.0
  %301 = vst [vmem:[%s3] sm:$0xff] %v269
  %302 = vst [vmem:[%s3 + $0x8] sm:$0xff] %v270
  %303 = vst [vmem:[%s3 + $0x10] sm:$0xff] %v271
  %304 = vst [vmem:[%s3 + $0x18] sm:$0xff] %v272
  %305 = vst [vmem:[%s3 + $0x20] sm:$0xff] %v273
  %306 = vst [vmem:[%s3 + $0x28] sm:$0xff] %v274
  %307 = vst [vmem:[%s3 + $0x30] sm:$0xff] %v275
  %308 = vst [vmem:[%s3 + $0x38] sm:$0xff] %v276
  %309 = vst [vmem:[%s3 + $0x40] sm:$0xff] %v277
  %310 = vst [vmem:[%s3 + $0x48] sm:$0xff] %v278
  %311 = vst [vmem:[%s3 + $0x50] sm:$0xff] %v279
  %312 = vst [vmem:[%s3 + $0x58] sm:$0xff] %v280
  %313 = vst [vmem:[%s3 + $0x60] sm:$0xff] %v281
  %314 = vst [vmem:[%s3 + $0x68] sm:$0xff] %v282
  %315 = vst [vmem:[%s3 + $0x70] sm:$0xff] %v283
  %316 = vst [vmem:[%s3 + $0x78] sm:$0xff] %v284
  %317 = vst [vmem:[%s3 + $0x80] sm:$0xff] %v285
  %318 = vst [vmem:[%s3 + $0x88] sm:$0xff] %v286
  %319 = vst [vmem:[%s3 + $0x90] sm:$0xff] %v287
  %320 = vst [vmem:[%s3 + $0x98] sm:$0xff] %v288
  %321 = vst [vmem:[%s3 + $0xa0] sm:$0xff] %v289
  %322 = vst [vmem:[%s3 + $0xa8] sm:$0xff] %v290
  %323 = vst [vmem:[%s3 + $0xb0] sm:$0xff] %v291
  %324 = vst [vmem:[%s3 + $0xb8] sm:$0xff] %v292
  %325 = vst [vmem:[%s3 + $0xc0] sm:$0xff] %v293
  %326 = vst [vmem:[%s3 + $0xc8] sm:$0xff] %v294
  %327 = vst [vmem:[%s3 + $0xd0] sm:$0xff] %v295
  %328 = vst [vmem:[%s3 + $0xd8] sm:$0xff] %v296
  %329 = vst [vmem:[%s3 + $0xe0] sm:$0xff] %v297
  %330 = vst [vmem:[%s3 + $0xe8] sm:$0xff] %v298
  %331 = vst [vmem:[%s3 + $0xf0] sm:$0xff] %v299
  %332 = vst [vmem:[%s3 + $0xf8] sm:$0xff] %v300
  // Predicated region
  $region14: #{inception_c_forward.8} parent=0 // pred_check
    _
  $region15: #{inception_c_forward.8} parent=0 // pred_check_branch
    %334 = sbr.rel (0) target = $region17
  $region16: #{inception_c_forward.8} parent=0 // pred_region
    _
  $region17: #{inception_c_forward.8} parent=0 // pred_fallthru
    _
  // Predicated region
  $region18: #{inception_c_forward.8} parent=0 // pred_check
    _
  $region19: #{inception_c_forward.8} parent=0 // pred_check_branch
    %336 = sbr.rel (0) target = $region21
  $region20: #{inception_c_forward.8} parent=0 // pred_region
    _
  $region21: #{inception_c_forward.8} parent=0 // pred_fallthru
    _

// kernel: inception_c_forward.15
$region0: #{inception_c_forward.15}
  #allocation0 [shape = 'u32[]', space=smem, size = 0x4, offset = 0x4, fixed_abs, tag = 'smem constant byte address 0x4 - core index']
  #allocation1 [shape = 'u32[144,128]{1,0:T(1,128)}', space=vmem, size = 0x12000, scoped, tag = 'internal scratch']
  %s0 = inlined_call_operand.vmem [shape: bf16[128,576], index: 0, kind: input, shape index: {}]
  %s1 = inlined_call_operand.vmem [shape: bf16[576,192], index: 1, kind: input, shape index: {}]
  %s2 = inlined_call_operand.vmem [shape: f32[1,192], index: 2, kind: input, shape index: {}]
  %s3 = inlined_call_operand.vmem [shape: f32[128,192], index: 3, kind: output, shape index: {}]
  %s4 = sld [smem:[#allocation0]]
  $region22: #{inception_c_forward.15} parent=0
    _
  %s6 = ssub.s32 1, %s4
  %s7 = scalar_select 0, %s6, %s4
  // Predicated region
  $region2: #{inception_c_forward.15} parent=0 // pred_check
    _
  $region3: #{inception_c_forward.15} parent=0 // pred_check_branch
    %9 = sbr.rel (0) target = $region5
  $region4: #{inception_c_forward.15} parent=0 // pred_region
    _
  $region5: #{inception_c_forward.15} parent=0 // pred_fallthru
    _
  // Predicated region
  $region6: #{inception_c_forward.15} parent=0 // pred_check
    _
  $region7: #{inception_c_forward.15} parent=0 // pred_check_branch
    %11 = sbr.rel (0) target = $region9
  $region8: #{inception_c_forward.15} parent=0 // pred_region
    _
  $region9: #{inception_c_forward.15} parent=0 // pred_fallthru
    _
  // Predicated region
  $region10: #{inception_c_forward.15} parent=0 // pred_check
    _
  $region11: #{inception_c_forward.15} parent=0 // pred_check_branch
    %13 = sbr.rel (0) target = $region13
  $region12: #{inception_c_forward.15} parent=0 // pred_region
    _
  $region13: #{inception_c_forward.15} parent=0 // pred_fallthru
    _
  %v15 = vld [vmem:[%s0] sm:$0xff]
  %v16 = vld [vmem:[%s0 + $0x8] sm:$0xff]
  %v17 = vld [vmem:[%s0 + $0x10] sm:$0xf]
  %v18 = vld [vmem:[%s0 + $0x14] sm:$0xff]
  %v19 = vld [vmem:[%s0 + $0x1c] sm:$0xff]
  %v20 = vld [vmem:[%s0 + $0x24] sm:$0xf]
  %v21 = vld [vmem:[%s0 + $0x28] sm:$0xff]
  %v22 = vld [vmem:[%s0 + $0x30] sm:$0xff]
  %v23 = vld [vmem:[%s0 + $0x38] sm:$0xf]
  %v24 = vld [vmem:[%s0 + $0x3c] sm:$0xff]
  %v25 = vld [vmem:[%s0 + $0x44] sm:$0xff]
  %v26 = vld [vmem:[%s0 + $0x4c] sm:$0xf]
  %v27 = vld [vmem:[%s0 + $0x50] sm:$0xff]
  %v28 = vld [vmem:[%s0 + $0x58] sm:$0xff]
  %v29 = vld [vmem:[%s0 + $0x60] sm:$0xf]
  %v30 = vld [vmem:[%s0 + $0x64] sm:$0xff]
  %v31 = vld [vmem:[%s0 + $0x6c] sm:$0xff]
  %v32 = vld [vmem:[%s0 + $0x74] sm:$0xf]
  %v33 = vld [vmem:[%s0 + $0x78] sm:$0xff]
  %v34 = vld [vmem:[%s0 + $0x80] sm:$0xff]
  %v35 = vld [vmem:[%s0 + $0x88] sm:$0xf]
  %v36 = vld [vmem:[%s0 + $0x8c] sm:$0xff]
  %v37 = vld [vmem:[%s0 + $0x94] sm:$0xff]
  %v38 = vld [vmem:[%s0 + $0x9c] sm:$0xf]
  %v39 = vld [vmem:[%s0 + $0xa0] sm:$0xff]
  %v40 = vld [vmem:[%s0 + $0xa8] sm:$0xff]
  %v41 = vld [vmem:[%s0 + $0xb0] sm:$0xf]
  %v42 = vld [vmem:[%s0 + $0xb4] sm:$0xff]
  %v43 = vld [vmem:[%s0 + $0xbc] sm:$0xff]
  %v44 = vld [vmem:[%s0 + $0xc4] sm:$0xf]
  %v45 = vld [vmem:[%s0 + $0xc8] sm:$0xff]
  %v46 = vld [vmem:[%s0 + $0xd0] sm:$0xff]
  %v47 = vld [vmem:[%s0 + $0xd8] sm:$0xf]
  %v48 = vld [vmem:[%s0 + $0xdc] sm:$0xff]
  %v49 = vld [vmem:[%s0 + $0xe4] sm:$0xff]
  %v50 = vld [vmem:[%s0 + $0xec] sm:$0xf]
  %v51 = vld [vmem:[%s0 + $0xf0] sm:$0xff]
  %v52 = vld [vmem:[%s0 + $0xf8] sm:$0xff]
  %v53 = vld [vmem:[%s0 + $0x100] sm:$0xf]
  %v54 = vld [vmem:[%s0 + $0x104] sm:$0xff]
  %v55 = vld [vmem:[%s0 + $0x10c] sm:$0xff]
  %v56 = vld [vmem:[%s0 + $0x114] sm:$0xf]
  %v57 = vld [vmem:[%s0 + $0x118] sm:$0xff]
  %v58 = vld [vmem:[%s0 + $0x120] sm:$0xff]
  %v59 = vld [vmem:[%s0 + $0x128] sm:$0xf]
  %v60 = vld [vmem:[%s0 + $0x12c] sm:$0xff]
  %v61 = vld [vmem:[%s0 + $0x134] sm:$0xff]
  %v62 = vld [vmem:[%s0 + $0x13c] sm:$0xf]
  %v63 = vld [vmem:[%s1] sm:$0xff]
  %v64 = vld [vmem:[%s1 + $0x8] sm:$0xff]
  %v65 = vld [vmem:[%s1 + $0x10] sm:$0xff]
  %v66 = vld [vmem:[%s1 + $0x18] sm:$0xff]
  %v67 = vld [vmem:[%s1 + $0x20] sm:$0xff]
  %v68 = vld [vmem:[%s1 + $0x28] sm:$0xff]
  %v69 = vld [vmem:[%s1 + $0x30] sm:$0xff]
  %v70 = vld [vmem:[%s1 + $0x38] sm:$0xff]
  %v71 = vld [vmem:[%s1 + $0x40] sm:$0xff]
  %v72 = vld [vmem:[%s1 + $0x48] sm:$0xff]
  %v73 = vld [vmem:[%s1 + $0x50] sm:$0xff]
  %v74 = vld [vmem:[%s1 + $0x58] sm:$0xff]
  %v75 = vld [vmem:[%s1 + $0x60] sm:$0xff]
  %v76 = vld [vmem:[%s1 + $0x68] sm:$0xff]
  %v77 = vld [vmem:[%s1 + $0x70] sm:$0xff]
  %v78 = vld [vmem:[%s1 + $0x78] sm:$0xff]
  %v79 = vld [vmem:[%s1 + $0x80] sm:$0xff]
  %v80 = vld [vmem:[%s1 + $0x88] sm:$0xff]
  %v81 = vld [vmem:[%s1 + $0x90] sm:$0xff]
  %v82 = vld [vmem:[%s1 + $0x98] sm:$0xff]
  %v83 = vld [vmem:[%s1 + $0xa0] sm:$0xff]
  %v84 = vld [vmem:[%s1 + $0xa8] sm:$0xff]
  %v85 = vld [vmem:[%s1 + $0xb0] sm:$0xff]
  %v86 = vld [vmem:[%s1 + $0xb8] sm:$0xff]
  %v87 = vld [vmem:[%s1 + $0xc0] sm:$0xff]
  %v88 = vld [vmem:[%s1 + $0xc8] sm:$0xff]
  %v89 = vld [vmem:[%s1 + $0xd0] sm:$0xff]
  %v90 = vld [vmem:[%s1 + $0xd8] sm:$0xff]
  %v91 = vld [vmem:[%s1 + $0xe0] sm:$0xff]
  %v92 = vld [vmem:[%s1 + $0xe8] sm:$0xff]
  %v93 = vld [vmem:[%s1 + $0xf0] sm:$0xff]
  %v94 = vld [vmem:[%s1 + $0xf8] sm:$0xff]
  %v95 = vld [vmem:[%s1 + $0x100] sm:$0xff]
  %v96 = vld [vmem:[%s1 + $0x108] sm:$0xff]
  %v97 = vld [vmem:[%s1 + $0x110] sm:$0xff]
  %v98 = vld [vmem:[%s1 + $0x118] sm:$0xff]
  %v99 = vld [vmem:[%s1 + $0x120] sm:$0xff]
  %v100 = vld [vmem:[%s1 + $0x128] sm:$0xff]
  %v101 = vld [vmem:[%s1 + $0x130] sm:$0xff]
  %v102 = vld [vmem:[%s1 + $0x138] sm:$0xff]
  %v103 = vld [vmem:[%s1 + $0x140] sm:$0xff]
  %v104 = vld [vmem:[%s1 + $0x148] sm:$0xff]
  %v105 = vld [vmem:[%s1 + $0x150] sm:$0xff]
  %v106 = vld [vmem:[%s1 + $0x158] sm:$0xff]
  %v107 = vld [vmem:[%s1 + $0x160] sm:$0xff]
  %v108 = vld [vmem:[%s1 + $0x168] sm:$0xff]
  %v109 = vld [vmem:[%s1 + $0x170] sm:$0xff]
  %v110 = vld [vmem:[%s1 + $0x178] sm:$0xff]
  %v111 = vld [vmem:[%s1 + $0x180] sm:$0xff]
  %v112 = vld [vmem:[%s1 + $0x188] sm:$0xff]
  %v113 = vld [vmem:[%s1 + $0x190] sm:$0xff]
  %v114 = vld [vmem:[%s1 + $0x198] sm:$0xff]
  %v115 = vld [vmem:[%s1 + $0x1a0] sm:$0xff]
  %v116 = vld [vmem:[%s1 + $0x1a8] sm:$0xff]
  %v117 = vld [vmem:[%s1 + $0x1b0] sm:$0xff]
  %v118 = vld [vmem:[%s1 + $0x1b8] sm:$0xff]
  %v119 = vld [vmem:[%s1 + $0x1c0] sm:$0xff]
  %v120 = vld [vmem:[%s1 + $0x1c8] sm:$0xff]
  %v121 = vld [vmem:[%s1 + $0x1d0] sm:$0xff]
  %v122 = vld [vmem:[%s1 + $0x1d8] sm:$0xff]
  %v123 = vld [vmem:[%s1 + $0x1e0] sm:$0xff]
  %v124 = vld [vmem:[%s1 + $0x1e8] sm:$0xff]
  %v125 = vld [vmem:[%s1 + $0x1f0] sm:$0xff]
  %v126 = vld [vmem:[%s1 + $0x1f8] sm:$0xff]
  %v127 = vld [vmem:[%s1 + $0x200] sm:$0xff]
  %v128 = vld [vmem:[%s1 + $0x208] sm:$0xff]
  %v129 = vld [vmem:[%s1 + $0x210] sm:$0xff]
  %v130 = vld [vmem:[%s1 + $0x218] sm:$0xff]
  %v131 = vld [vmem:[%s1 + $0x220] sm:$0xff]
  %v132 = vld [vmem:[%s1 + $0x228] sm:$0xff]
  %v133 = vld [vmem:[%s1 + $0x230] sm:$0xff]
  %v134 = vld [vmem:[%s1 + $0x238] sm:$0xff]
  %v135 = vld [vmem:[%s2] sm:$0x3]
  %v137 = vlaneseq
  %v138 = vshrl.u32 %v137, 7
  %v139 = vsub.s32 0, %v138
  %v140 = vrot.slane %v135, %v139
  %v141 = vlaneseq
  %v142 = vshrl.u32 %v141, 7
  %v143 = vsub.s32 1, %v142
  %v144 = vrot.slane %v135, %v143
  %v195 = vunpack.c.l.b16 %v15
  %v196 = vunpack.c.h.b16 %v15
  %v197 = vunpack.c.l.b16 %v16
  %v198 = vunpack.c.h.b16 %v16
  %v199 = vunpack.c.l.b16 %v17
  %v200 = vunpack.c.l.b16 %v18
  %v201 = vunpack.c.h.b16 %v18
  %v202 = vunpack.c.l.b16 %v19
  %v203 = vunpack.c.h.b16 %v19
  %v204 = vunpack.c.l.b16 %v20
  %v205 = vunpack.c.l.b16 %v21
  %v206 = vunpack.c.h.b16 %v21
  %v207 = vunpack.c.l.b16 %v22
  %v208 = vunpack.c.h.b16 %v22
  %v209 = vunpack.c.l.b16 %v23
  %v210 = vunpack.c.l.b16 %v24
  %v211 = vunpack.c.h.b16 %v24
  %v212 = vunpack.c.l.b16 %v25
  %v213 = vunpack.c.h.b16 %v25
  %v214 = vunpack.c.l.b16 %v26
  %v215 = vunpack.c.l.b16 %v27
  %v216 = vunpack.c.h.b16 %v27
  %v217 = vunpack.c.l.b16 %v28
  %v218 = vunpack.c.h.b16 %v28
  %v219 = vunpack.c.l.b16 %v29
  %v220 = vunpack.c.l.b16 %v30
  %v221 = vunpack.c.h.b16 %v30
  %v222 = vunpack.c.l.b16 %v31
  %v223 = vunpack.c.h.b16 %v31
  %v224 = vunpack.c.l.b16 %v32
  %v225 = vunpack.c.l.b16 %v33
  %v226 = vunpack.c.h.b16 %v33
  %v227 = vunpack.c.l.b16 %v34
  %v228 = vunpack.c.h.b16 %v34
  %v229 = vunpack.c.l.b16 %v35
  %v230 = vunpack.c.l.b16 %v36
  %v231 = vunpack.c.h.b16 %v36
  %v232 = vunpack.c.l.b16 %v37
  %v233 = vunpack.c.h.b16 %v37
  %v234 = vunpack.c.l.b16 %v38
  %v235 = vunpack.c.l.b16 %v39
  %v236 = vunpack.c.h.b16 %v39
  %v237 = vunpack.c.l.b16 %v40
  %v238 = vunpack.c.h.b16 %v40
  %v239 = vunpack.c.l.b16 %v41
  %v240 = vunpack.c.l.b16 %v42
  %v241 = vunpack.c.h.b16 %v42
  %v242 = vunpack.c.l.b16 %v43
  %v243 = vunpack.c.h.b16 %v43
  %v244 = vunpack.c.l.b16 %v44
  %v245 = vunpack.c.l.b16 %v45
  %v246 = vunpack.c.h.b16 %v45
  %v247 = vunpack.c.l.b16 %v46
  %v248 = vunpack.c.h.b16 %v46
  %v249 = vunpack.c.l.b16 %v47
  %v250 = vunpack.c.l.b16 %v48
  %v251 = vunpack.c.h.b16 %v48
  %v252 = vunpack.c.l.b16 %v49
  %v253 = vunpack.c.h.b16 %v49
  %v254 = vunpack.c.l.b16 %v50
  %v255 = vunpack.c.l.b16 %v51
  %v256 = vunpack.c.h.b16 %v51
  %v257 = vunpack.c.l.b16 %v52
  %v258 = vunpack.c.h.b16 %v52
  %v259 = vunpack.c.l.b16 %v53
  %v260 = vunpack.c.l.b16 %v54
  %v261 = vunpack.c.h.b16 %v54
  %v262 = vunpack.c.l.b16 %v55
  %v263 = vunpack.c.h.b16 %v55
  %v264 = vunpack.c.l.b16 %v56
  %v265 = vunpack.c.l.b16 %v57
  %v266 = vunpack.c.h.b16 %v57
  %v267 = vunpack.c.l.b16 %v58
  %v268 = vunpack.c.h.b16 %v58
  %v269 = vunpack.c.l.b16 %v59
  %v270 = vunpack.c.l.b16 %v60
  %v271 = vunpack.c.h.b16 %v60
  %v272 = vunpack.c.l.b16 %v61
  %v273 = vunpack.c.h.b16 %v61
  %v274 = vunpack.c.l.b16 %v62
  %v275 = vpack.c.b16 %v200, %v195
  %v276 = vpack.c.b16 %v201, %v196
  %v277 = vpack.c.b16 %v202, %v197
  %v278 = vpack.c.b16 %v203, %v198
  %v279 = vpack.c.b16 %v204, %v199
  %v280 = vpack.c.b16 %v210, %v205
  %v281 = vpack.c.b16 %v211, %v206
  %v282 = vpack.c.b16 %v212, %v207
  %v283 = vpack.c.b16 %v213, %v208
  %v284 = vpack.c.b16 %v214, %v209
  %v285 = vpack.c.b16 %v220, %v215
  %v286 = vpack.c.b16 %v221, %v216
  %v287 = vpack.c.b16 %v222, %v217
  %v288 = vpack.c.b16 %v223, %v218
  %v289 = vpack.c.b16 %v224, %v219
  %v290 = vpack.c.b16 %v230, %v225
  %v291 = vpack.c.b16 %v231, %v226
  %v292 = vpack.c.b16 %v232, %v227
  %v293 = vpack.c.b16 %v233, %v228
  %v294 = vpack.c.b16 %v234, %v229
  %v295 = vpack.c.b16 %v240, %v235
  %v296 = vpack.c.b16 %v241, %v236
  %v297 = vpack.c.b16 %v242, %v237
  %v298 = vpack.c.b16 %v243, %v238
  %v299 = vpack.c.b16 %v244, %v239
  %v300 = vpack.c.b16 %v250, %v245
  %v301 = vpack.c.b16 %v251, %v246
  %v302 = vpack.c.b16 %v252, %v247
  %v303 = vpack.c.b16 %v253, %v248
  %v304 = vpack.c.b16 %v254, %v249
  %v305 = vpack.c.b16 %v260, %v255
  %v306 = vpack.c.b16 %v261, %v256
  %v307 = vpack.c.b16 %v262, %v257
  %v308 = vpack.c.b16 %v263, %v258
  %v309 = vpack.c.b16 %v264, %v259
  %v310 = vpack.c.b16 %v270, %v265
  %v311 = vpack.c.b16 %v271, %v266
  %v312 = vpack.c.b16 %v272, %v267
  %v313 = vpack.c.b16 %v273, %v268
  %v314 = vpack.c.b16 %v274, %v269
  %v419 = vunpack.c.l.b16 %v63
  %v420 = vunpack.c.h.b16 %v63
  %v421 = vunpack.c.l.b16 %v64
  %v422 = vunpack.c.h.b16 %v64
  %v423 = vunpack.c.l.b16 %v65
  %v424 = vunpack.c.h.b16 %v65
  %v425 = vunpack.c.l.b16 %v66
  %v426 = vunpack.c.h.b16 %v66
  %v427 = vunpack.c.l.b16 %v67
  %v428 = vunpack.c.h.b16 %v67
  %v429 = vunpack.c.l.b16 %v68
  %v430 = vunpack.c.h.b16 %v68
  %v431 = vunpack.c.l.b16 %v69
  %v432 = vunpack.c.h.b16 %v69
  %v433 = vunpack.c.l.b16 %v70
  %v434 = vunpack.c.h.b16 %v70
  %v435 = vunpack.c.l.b16 %v71
  %v436 = vunpack.c.h.b16 %v71
  %v437 = vunpack.c.l.b16 %v72
  %v438 = vunpack.c.h.b16 %v72
  %v439 = vunpack.c.l.b16 %v73
  %v440 = vunpack.c.h.b16 %v73
  %v441 = vunpack.c.l.b16 %v74
  %v442 = vunpack.c.h.b16 %v74
  %v443 = vunpack.c.l.b16 %v75
  %v444 = vunpack.c.h.b16 %v75
  %v445 = vunpack.c.l.b16 %v76
  %v446 = vunpack.c.h.b16 %v76
  %v447 = vunpack.c.l.b16 %v77
  %v448 = vunpack.c.h.b16 %v77
  %v449 = vunpack.c.l.b16 %v78
  %v450 = vunpack.c.h.b16 %v78
  %v451 = vunpack.c.l.b16 %v79
  %v452 = vunpack.c.h.b16 %v79
  %v453 = vunpack.c.l.b16 %v80
  %v454 = vunpack.c.h.b16 %v80
  %v455 = vunpack.c.l.b16 %v81
  %v456 = vunpack.c.h.b16 %v81
  %v457 = vunpack.c.l.b16 %v82
  %v458 = vunpack.c.h.b16 %v82
  %v459 = vunpack.c.l.b16 %v83
  %v460 = vunpack.c.h.b16 %v83
  %v461 = vunpack.c.l.b16 %v84
  %v462 = vunpack.c.h.b16 %v84
  %v463 = vunpack.c.l.b16 %v85
  %v464 = vunpack.c.h.b16 %v85
  %v465 = vunpack.c.l.b16 %v86
  %v466 = vunpack.c.h.b16 %v86
  %v467 = vunpack.c.l.b16 %v87
  %v468 = vunpack.c.h.b16 %v87
  %v469 = vunpack.c.l.b16 %v88
  %v470 = vunpack.c.h.b16 %v88
  %v471 = vunpack.c.l.b16 %v89
  %v472 = vunpack.c.h.b16 %v89
  %v473 = vunpack.c.l.b16 %v90
  %v474 = vunpack.c.h.b16 %v90
  %v475 = vunpack.c.l.b16 %v91
  %v476 = vunpack.c.h.b16 %v91
  %v477 = vunpack.c.l.b16 %v92
  %v478 = vunpack.c.h.b16 %v92
  %v479 = vunpack.c.l.b16 %v93
  %v480 = vunpack.c.h.b16 %v93
  %v481 = vunpack.c.l.b16 %v94
  %v482 = vunpack.c.h.b16 %v94
  %v483 = vunpack.c.l.b16 %v95
  %v484 = vunpack.c.h.b16 %v95
  %v485 = vunpack.c.l.b16 %v96
  %v486 = vunpack.c.h.b16 %v96
  %v487 = vunpack.c.l.b16 %v97
  %v488 = vunpack.c.h.b16 %v97
  %v489 = vunpack.c.l.b16 %v98
  %v490 = vunpack.c.h.b16 %v98
  %v491 = vunpack.c.l.b16 %v99
  %v492 = vunpack.c.h.b16 %v99
  %v493 = vunpack.c.l.b16 %v100
  %v494 = vunpack.c.h.b16 %v100
  %v495 = vunpack.c.l.b16 %v101
  %v496 = vunpack.c.h.b16 %v101
  %v497 = vunpack.c.l.b16 %v102
  %v498 = vunpack.c.h.b16 %v102
  %v499 = vunpack.c.l.b16 %v103
  %v500 = vunpack.c.h.b16 %v103
  %v501 = vunpack.c.l.b16 %v104
  %v502 = vunpack.c.h.b16 %v104
  %v503 = vunpack.c.l.b16 %v105
  %v504 = vunpack.c.h.b16 %v105
  %v505 = vunpack.c.l.b16 %v106
  %v506 = vunpack.c.h.b16 %v106
  %v507 = vunpack.c.l.b16 %v107
  %v508 = vunpack.c.h.b16 %v107
  %v509 = vunpack.c.l.b16 %v108
  %v510 = vunpack.c.h.b16 %v108
  %v511 = vunpack.c.l.b16 %v109
  %v512 = vunpack.c.h.b16 %v109
  %v513 = vunpack.c.l.b16 %v110
  %v514 = vunpack.c.h.b16 %v110
  %v515 = vunpack.c.l.b16 %v111
  %v516 = vunpack.c.h.b16 %v111
  %v517 = vunpack.c.l.b16 %v112
  %v518 = vunpack.c.h.b16 %v112
  %v519 = vunpack.c.l.b16 %v113
  %v520 = vunpack.c.h.b16 %v113
  %v521 = vunpack.c.l.b16 %v114
  %v522 = vunpack.c.h.b16 %v114
  %v523 = vunpack.c.l.b16 %v115
  %v524 = vunpack.c.h.b16 %v115
  %v525 = vunpack.c.l.b16 %v116
  %v526 = vunpack.c.h.b16 %v116
  %v527 = vunpack.c.l.b16 %v117
  %v528 = vunpack.c.h.b16 %v117
  %v529 = vunpack.c.l.b16 %v118
  %v530 = vunpack.c.h.b16 %v118
  %v531 = vunpack.c.l.b16 %v119
  %v532 = vunpack.c.h.b16 %v119
  %v533 = vunpack.c.l.b16 %v120
  %v534 = vunpack.c.h.b16 %v120
  %v535 = vunpack.c.l.b16 %v121
  %v536 = vunpack.c.h.b16 %v121
  %v537 = vunpack.c.l.b16 %v122
  %v538 = vunpack.c.h.b16 %v122
  %v539 = vunpack.c.l.b16 %v123
  %v540 = vunpack.c.h.b16 %v123
  %v541 = vunpack.c.l.b16 %v124
  %v542 = vunpack.c.h.b16 %v124
  %v543 = vunpack.c.l.b16 %v125
  %v544 = vunpack.c.h.b16 %v125
  %v545 = vunpack.c.l.b16 %v126
  %v546 = vunpack.c.h.b16 %v126
  %v547 = vunpack.c.l.b16 %v127
  %v548 = vunpack.c.h.b16 %v127
  %v549 = vunpack.c.l.b16 %v128
  %v550 = vunpack.c.h.b16 %v128
  %v551 = vunpack.c.l.b16 %v129
  %v552 = vunpack.c.h.b16 %v129
  %v553 = vunpack.c.l.b16 %v130
  %v554 = vunpack.c.h.b16 %v130
  %v555 = vunpack.c.l.b16 %v131
  %v556 = vunpack.c.h.b16 %v131
  %v557 = vunpack.c.l.b16 %v132
  %v558 = vunpack.c.h.b16 %v132
  %v559 = vunpack.c.l.b16 %v133
  %v560 = vunpack.c.h.b16 %v133
  %v561 = vunpack.c.l.b16 %v134
  %v562 = vunpack.c.h.b16 %v134
  %v563 = vpack.c.b16 %v421, %v419
  %v564 = vpack.c.b16 %v422, %v420
  %v565 = vpack.c.b16 %v425, %v423
  %v566 = vpack.c.b16 %v426, %v424
  %v567 = vpack.c.b16 %v429, %v427
  %v568 = vpack.c.b16 %v430, %v428
  %v569 = vpack.c.b16 %v433, %v431
  %v570 = vpack.c.b16 %v434, %v432
  %v571 = vpack.c.b16 %v437, %v435
  %v572 = vpack.c.b16 %v438, %v436
  %v573 = vpack.c.b16 %v441, %v439
  %v574 = vpack.c.b16 %v442, %v440
  %v575 = vpack.c.b16 %v445, %v443
  %v576 = vpack.c.b16 %v446, %v444
  %v577 = vpack.c.b16 %v449, %v447
  %v578 = vpack.c.b16 %v450, %v448
  %v579 = vpack.c.b16 %v453, %v451
  %v580 = vpack.c.b16 %v454, %v452
  %v581 = vpack.c.b16 %v457, %v455
  %v582 = vpack.c.b16 %v458, %v456
  %v583 = vpack.c.b16 %v461, %v459
  %v584 = vpack.c.b16 %v462, %v460
  %v585 = vpack.c.b16 %v465, %v463
  %v586 = vpack.c.b16 %v466, %v464
  %v587 = vpack.c.b16 %v469, %v467
  %v588 = vpack.c.b16 %v470, %v468
  %v589 = vpack.c.b16 %v473, %v471
  %v590 = vpack.c.b16 %v474, %v472
  %v591 = vpack.c.b16 %v477, %v475
  %v592 = vpack.c.b16 %v478, %v476
  %v593 = vpack.c.b16 %v481, %v479
  %v594 = vpack.c.b16 %v482, %v480
  %v595 = vpack.c.b16 %v485, %v483
  %v596 = vpack.c.b16 %v486, %v484
  %v597 = vpack.c.b16 %v489, %v487
  %v598 = vpack.c.b16 %v490, %v488
  %v599 = vpack.c.b16 %v493, %v491
  %v600 = vpack.c.b16 %v494, %v492
  %v601 = vpack.c.b16 %v497, %v495
  %v602 = vpack.c.b16 %v498, %v496
  %v603 = vpack.c.b16 %v501, %v499
  %v604 = vpack.c.b16 %v502, %v500
  %v605 = vpack.c.b16 %v505, %v503
  %v606 = vpack.c.b16 %v506, %v504
  %v607 = vpack.c.b16 %v509, %v507
  %v608 = vpack.c.b16 %v510, %v508
  %v609 = vpack.c.b16 %v513, %v511
  %v610 = vpack.c.b16 %v514, %v512
  %v611 = vpack.c.b16 %v517, %v515
  %v612 = vpack.c.b16 %v518, %v516
  %v613 = vpack.c.b16 %v521, %v519
  %v614 = vpack.c.b16 %v522, %v520
  %v615 = vpack.c.b16 %v525, %v523
  %v616 = vpack.c.b16 %v526, %v524
  %v617 = vpack.c.b16 %v529, %v527
  %v618 = vpack.c.b16 %v530, %v528
  %v619 = vpack.c.b16 %v533, %v531
  %v620 = vpack.c.b16 %v534, %v532
  %v621 = vpack.c.b16 %v537, %v535
  %v622 = vpack.c.b16 %v538, %v536
  %v623 = vpack.c.b16 %v541, %v539
  %v624 = vpack.c.b16 %v542, %v540
  %v625 = vpack.c.b16 %v545, %v543
  %v626 = vpack.c.b16 %v546, %v544
  %v627 = vpack.c.b16 %v549, %v547
  %v628 = vpack.c.b16 %v550, %v548
  %v629 = vpack.c.b16 %v553, %v551
  %v630 = vpack.c.b16 %v554, %v552
  %v631 = vpack.c.b16 %v557, %v555
  %v632 = vpack.c.b16 %v558, %v556
  %v633 = vpack.c.b16 %v561, %v559
  %v634 = vpack.c.b16 %v562, %v560
  %vm707 = vcmask 523264
  %v709 = vsel %vm707, %v279, 0
  %v712 = vsel %vm707, %v284, 0
  %v715 = vsel %vm707, %v289, 0
  %v718 = vsel %vm707, %v294, 0
  %v721 = vsel %vm707, %v299, 0
  %v724 = vsel %vm707, %v304, 0
  %v727 = vsel %vm707, %v309, 0
  %v730 = vsel %vm707, %v314, 0
  %732 = vmatprep.subr.bf16.mxu0 %v578
  %733 = vmatpush1.bf16.msra.mxu0 %v577
  %734 = vmatprep.subr.bf16.mxu0 %v576
  %735 = vmatpush1.bf16.msra.mxu0 %v575
  %736 = vmatprep.subr.bf16.mxu0 %v574
  %737 = vmatpush1.bf16.msra.mxu0 %v573
  %738 = vmatprep.subr.bf16.mxu0 %v572
  %739 = vmatpush1.bf16.msra.mxu0 %v571
  %740 = vmatprep.subr.bf16.mxu0 %v570
  %741 = vmatpush1.bf16.msra.mxu0 %v569
  %742 = vmatprep.subr.bf16.mxu0 %v568
  %743 = vmatpush1.bf16.msra.mxu0 %v567
  %744 = vmatprep.subr.bf16.mxu0 %v566
  %745 = vmatpush1.bf16.msra.mxu0 %v565
  %746 = vmatprep.subr.bf16.mxu0 %v564
  %747 = vmatpush1.bf16.msra.mxu0 %v563
  %748 = vmatprep.subr.bf16.mxu0 %v594
  %749 = vmatpush2.bf16.msra.mxu0 %v593
  %750 = vmatprep.subr.bf16.mxu0 %v592
  %751 = vmatpush2.bf16.msra.mxu0 %v591
  %752 = vmatprep.subr.bf16.mxu0 %v590
  %753 = vmatpush2.bf16.msra.mxu0 %v589
  %754 = vmatprep.subr.bf16.mxu0 %v588
  %755 = vmatpush2.bf16.msra.mxu0 %v587
  %756 = vmatprep.subr.bf16.mxu0 %v586
  %757 = vmatpush2.bf16.msra.mxu0 %v585
  %758 = vmatprep.subr.bf16.mxu0 %v584
  %759 = vmatpush2.bf16.msra.mxu0 %v583
  %760 = vmatprep.subr.bf16.mxu0 %v582
  %761 = vmatpush2.bf16.msra.mxu0 %v581
  %762 = vmatprep.subr.bf16.mxu0 %v580
  %763 = vmatpush2.bf16.msra.mxu0 %v579
  %764 = vmatprep.mubr.bf16.mxu0 %v276
  %765 = vmatmul.mubr.bf16.gmra.mxu0 %v275
  %v766 = vpop.f32.mrf.mxu0
  %v767 = vadd.f32 %v140, %v766
  %v768 = vpop.f32.mrf.mxu0
  %v769 = vadd.f32 %v144, %v768
  %v770 = vpop.f32.mrf.mxu0
  %v771 = vadd.f32 %v140, %v770
  %v772 = vpop.f32.mrf.mxu0
  %v773 = vadd.f32 %v144, %v772
  %774 = vmatprep.mubr.bf16.mxu0 %v281
  %775 = vmatmul.mubr.bf16.gmra.mxu0 %v280
  %v776 = vpop.f32.mrf.mxu0
  %v777 = vadd.f32 %v140, %v776
  %v778 = vpop.f32.mrf.mxu0
  %v779 = vadd.f32 %v144, %v778
  %v780 = vpop.f32.mrf.mxu0
  %v781 = vadd.f32 %v140, %v780
  %v782 = vpop.f32.mrf.mxu0
  %v783 = vadd.f32 %v144, %v782
  %784 = vmatprep.mubr.bf16.mxu0 %v286
  %785 = vmatmul.mubr.bf16.gmra.mxu0 %v285
  %v786 = vpop.f32.mrf.mxu0
  %v787 = vadd.f32 %v140, %v786
  %v788 = vpop.f32.mrf.mxu0
  %v789 = vadd.f32 %v144, %v788
  %v790 = vpop.f32.mrf.mxu0
  %v791 = vadd.f32 %v140, %v790
  %v792 = vpop.f32.mrf.mxu0
  %v793 = vadd.f32 %v144, %v792
  %794 = vmatprep.mubr.bf16.mxu0 %v291
  %795 = vmatmul.mubr.bf16.gmra.mxu0 %v290
  %v796 = vpop.f32.mrf.mxu0
  %v797 = vadd.f32 %v140, %v796
  %v798 = vpop.f32.mrf.mxu0
  %v799 = vadd.f32 %v144, %v798
  %v800 = vpop.f32.mrf.mxu0
  %v801 = vadd.f32 %v140, %v800
  %v802 = vpop.f32.mrf.mxu0
  %v803 = vadd.f32 %v144, %v802
  %804 = vmatprep.mubr.bf16.mxu0 %v296
  %805 = vmatmul.mubr.bf16.gmra.mxu0 %v295
  %v806 = vpop.f32.mrf.mxu0
  %v807 = vadd.f32 %v140, %v806
  %v808 = vpop.f32.mrf.mxu0
  %v809 = vadd.f32 %v144, %v808
  %v810 = vpop.f32.mrf.mxu0
  %v811 = vadd.f32 %v140, %v810
  %v812 = vpop.f32.mrf.mxu0
  %v813 = vadd.f32 %v144, %v812
  %814 = vmatprep.mubr.bf16.mxu0 %v301
  %815 = vmatmul.mubr.bf16.gmra.mxu0 %v300
  %v816 = vpop.f32.mrf.mxu0
  %v817 = vadd.f32 %v140, %v816
  %v818 = vpop.f32.mrf.mxu0
  %v819 = vadd.f32 %v144, %v818
  %v820 = vpop.f32.mrf.mxu0
  %v821 = vadd.f32 %v140, %v820
  %v822 = vpop.f32.mrf.mxu0
  %v823 = vadd.f32 %v144, %v822
  %824 = vmatprep.mubr.bf16.mxu0 %v306
  %825 = vmatmul.mubr.bf16.gmra.mxu0 %v305
  %v826 = vpop.f32.mrf.mxu0
  %v827 = vadd.f32 %v140, %v826
  %v828 = vpop.f32.mrf.mxu0
  %v829 = vadd.f32 %v144, %v828
  %v830 = vpop.f32.mrf.mxu0
  %v831 = vadd.f32 %v140, %v830
  %v832 = vpop.f32.mrf.mxu0
  %v833 = vadd.f32 %v144, %v832
  %834 = vmatprep.mubr.bf16.mxu0 %v311
  %835 = vmatmul.mubr.bf16.gmra.mxu0 %v310
  %v836 = vpop.f32.mrf.mxu0
  %v837 = vadd.f32 %v140, %v836
  %v838 = vpop.f32.mrf.mxu0
  %v839 = vadd.f32 %v144, %v838
  %v840 = vpop.f32.mrf.mxu0
  %v841 = vadd.f32 %v140, %v840
  %v842 = vpop.f32.mrf.mxu0
  %v843 = vadd.f32 %v144, %v842
  %844 = vdwg.mxu0
  %845 = vmatprep.subr.bf16.mxu0 %v610
  %846 = vmatpush1.bf16.msra.mxu0 %v609
  %847 = vmatprep.subr.bf16.mxu0 %v608
  %848 = vmatpush1.bf16.msra.mxu0 %v607
  %849 = vmatprep.subr.bf16.mxu0 %v606
  %850 = vmatpush1.bf16.msra.mxu0 %v605
  %851 = vmatprep.subr.bf16.mxu0 %v604
  %852 = vmatpush1.bf16.msra.mxu0 %v603
  %853 = vmatprep.subr.bf16.mxu0 %v602
  %854 = vmatpush1.bf16.msra.mxu0 %v601
  %855 = vmatprep.subr.bf16.mxu0 %v600
  %856 = vmatpush1.bf16.msra.mxu0 %v599
  %857 = vmatprep.subr.bf16.mxu0 %v598
  %858 = vmatpush1.bf16.msra.mxu0 %v597
  %859 = vmatprep.subr.bf16.mxu0 %v596
  %860 = vmatpush1.bf16.msra.mxu0 %v595
  %861 = vmatprep.subr.bf16.mxu0 %v626
  %862 = vmatpush2.bf16.msra.mxu0 %v625
  %863 = vmatprep.subr.bf16.mxu0 %v624
  %864 = vmatpush2.bf16.msra.mxu0 %v623
  %865 = vmatprep.subr.bf16.mxu0 %v622
  %866 = vmatpush2.bf16.msra.mxu0 %v621
  %867 = vmatprep.subr.bf16.mxu0 %v620
  %868 = vmatpush2.bf16.msra.mxu0 %v619
  %869 = vmatprep.subr.bf16.mxu0 %v618
  %870 = vmatpush2.bf16.msra.mxu0 %v617
  %871 = vmatprep.subr.bf16.mxu0 %v616
  %872 = vmatpush2.bf16.msra.mxu0 %v615
  %873 = vmatprep.subr.bf16.mxu0 %v614
  %874 = vmatpush2.bf16.msra.mxu0 %v613
  %875 = vmatprep.subr.bf16.mxu0 %v612
  %876 = vmatpush2.bf16.msra.mxu0 %v611
  %877 = vmatprep.mubr.bf16.mxu0 %v278
  %878 = vmatmul.mubr.bf16.gmra.mxu0 %v277
  %v879 = vpop.f32.mrf.mxu0
  %v880 = vadd.f32 %v767, %v879
  %v881 = vpop.f32.mrf.mxu0
  %v882 = vadd.f32 %v769, %v881
  %v883 = vpop.f32.mrf.mxu0
  %v884 = vadd.f32 %v771, %v883
  %v885 = vpop.f32.mrf.mxu0
  %v886 = vadd.f32 %v773, %v885
  %887 = vmatprep.mubr.bf16.mxu0 %v283
  %888 = vmatmul.mubr.bf16.gmra.mxu0 %v282
  %v889 = vpop.f32.mrf.mxu0
  %v890 = vadd.f32 %v777, %v889
  %v891 = vpop.f32.mrf.mxu0
  %v892 = vadd.f32 %v779, %v891
  %v893 = vpop.f32.mrf.mxu0
  %v894 = vadd.f32 %v781, %v893
  %v895 = vpop.f32.mrf.mxu0
  %v896 = vadd.f32 %v783, %v895
  %897 = vmatprep.mubr.bf16.mxu0 %v288
  %898 = vmatmul.mubr.bf16.gmra.mxu0 %v287
  %v899 = vpop.f32.mrf.mxu0
  %v900 = vadd.f32 %v787, %v899
  %v901 = vpop.f32.mrf.mxu0
  %v902 = vadd.f32 %v789, %v901
  %v903 = vpop.f32.mrf.mxu0
  %v904 = vadd.f32 %v791, %v903
  %v905 = vpop.f32.mrf.mxu0
  %v906 = vadd.f32 %v793, %v905
  %907 = vmatprep.mubr.bf16.mxu0 %v293
  %908 = vmatmul.mubr.bf16.gmra.mxu0 %v292
  %v909 = vpop.f32.mrf.mxu0
  %v910 = vadd.f32 %v797, %v909
  %v911 = vpop.f32.mrf.mxu0
  %v912 = vadd.f32 %v799, %v911
  %v913 = vpop.f32.mrf.mxu0
  %v914 = vadd.f32 %v801, %v913
  %v915 = vpop.f32.mrf.mxu0
  %v916 = vadd.f32 %v803, %v915
  %917 = vmatprep.mubr.bf16.mxu0 %v298
  %918 = vmatmul.mubr.bf16.gmra.mxu0 %v297
  %v919 = vpop.f32.mrf.mxu0
  %v920 = vadd.f32 %v807, %v919
  %v921 = vpop.f32.mrf.mxu0
  %v922 = vadd.f32 %v809, %v921
  %v923 = vpop.f32.mrf.mxu0
  %v924 = vadd.f32 %v811, %v923
  %v925 = vpop.f32.mrf.mxu0
  %v926 = vadd.f32 %v813, %v925
  %927 = vmatprep.mubr.bf16.mxu0 %v303
  %928 = vmatmul.mubr.bf16.gmra.mxu0 %v302
  %v929 = vpop.f32.mrf.mxu0
  %v930 = vadd.f32 %v817, %v929
  %v931 = vpop.f32.mrf.mxu0
  %v932 = vadd.f32 %v819, %v931
  %v933 = vpop.f32.mrf.mxu0
  %v934 = vadd.f32 %v821, %v933
  %v935 = vpop.f32.mrf.mxu0
  %v936 = vadd.f32 %v823, %v935
  %937 = vmatprep.mubr.bf16.mxu0 %v308
  %938 = vmatmul.mubr.bf16.gmra.mxu0 %v307
  %v939 = vpop.f32.mrf.mxu0
  %v940 = vadd.f32 %v827, %v939
  %v941 = vpop.f32.mrf.mxu0
  %v942 = vadd.f32 %v829, %v941
  %v943 = vpop.f32.mrf.mxu0
  %v944 = vadd.f32 %v831, %v943
  %v945 = vpop.f32.mrf.mxu0
  %v946 = vadd.f32 %v833, %v945
  %947 = vmatprep.mubr.bf16.mxu0 %v313
  %948 = vmatmul.mubr.bf16.gmra.mxu0 %v312
  %v949 = vpop.f32.mrf.mxu0
  %v950 = vadd.f32 %v837, %v949
  %v951 = vpop.f32.mrf.mxu0
  %v952 = vadd.f32 %v839, %v951
  %v953 = vpop.f32.mrf.mxu0
  %v954 = vadd.f32 %v841, %v953
  %v955 = vpop.f32.mrf.mxu0
  %v956 = vadd.f32 %v843, %v955
  %957 = vdwg.mxu0
  %958 = vmatprep.subr.bf16.mxu0 0
  %959 = vmatpush1.bf16.msra.mxu0 0
  %960 = vmatprep.subr.bf16.mxu0 0
  %961 = vmatpush1.bf16.msra.mxu0 0
  %962 = vmatprep.subr.bf16.mxu0 0
  %963 = vmatpush1.bf16.msra.mxu0 0
  %964 = vmatprep.subr.bf16.mxu0 0
  %965 = vmatpush1.bf16.msra.mxu0 0
  %966 = vmatprep.subr.bf16.mxu0 %v634
  %967 = vmatpush1.bf16.msra.mxu0 %v633
  %968 = vmatprep.subr.bf16.mxu0 %v632
  %969 = vmatpush1.bf16.msra.mxu0 %v631
  %970 = vmatprep.subr.bf16.mxu0 %v630
  %971 = vmatpush1.bf16.msra.mxu0 %v629
  %972 = vmatprep.subr.bf16.mxu0 %v628
  %973 = vmatpush1.bf16.msra.mxu0 %v627
  %974 = vmatprep.subr.bf16.mxu0 0
  %975 = vmatpush2.bf16.msra.mxu0 0
  %976 = vmatprep.subr.bf16.mxu0 0
  %977 = vmatpush2.bf16.msra.mxu0 0
  %978 = vmatprep.subr.bf16.mxu0 0
  %979 = vmatpush2.bf16.msra.mxu0 0
  %980 = vmatprep.subr.bf16.mxu0 0
  %981 = vmatpush2.bf16.msra.mxu0 0
  %982 = vmatprep.subr.bf16.mxu0 0
  %983 = vmatpush2.bf16.msra.mxu0 0
  %984 = vmatprep.subr.bf16.mxu0 0
  %985 = vmatpush2.bf16.msra.mxu0 0
  %986 = vmatprep.subr.bf16.mxu0 0
  %987 = vmatpush2.bf16.msra.mxu0 0
  %988 = vmatprep.subr.bf16.mxu0 0
  %989 = vmatpush2.bf16.msra.mxu0 0
  %990 = vmatprep.mubr.bf16.mxu0 0
  %991 = vmatmul.mubr.bf16.gmra.mxu0 %v709
  %v992 = vpop.f32.mrf.mxu0
  %v993 = vadd.f32 %v880, %v992
  %v994 = vpop.f32.mrf.mxu0
  %v995 = vadd.f32 %v882, %v994
  %v996 = vpop.f32.mrf.mxu0
  %v997 = vadd.f32 %v884, %v996
  %v998 = vpop.f32.mrf.mxu0
  %v999 = vadd.f32 %v886, %v998
  %1000 = vmatprep.mubr.bf16.mxu0 0
  %1001 = vmatmul.mubr.bf16.gmra.mxu0 %v712
  %v1002 = vpop.f32.mrf.mxu0
  %v1003 = vadd.f32 %v890, %v1002
  %v1004 = vpop.f32.mrf.mxu0
  %v1005 = vadd.f32 %v892, %v1004
  %v1006 = vpop.f32.mrf.mxu0
  %v1007 = vadd.f32 %v894, %v1006
  %v1008 = vpop.f32.mrf.mxu0
  %v1009 = vadd.f32 %v896, %v1008
  %1010 = vmatprep.mubr.bf16.mxu0 0
  %1011 = vmatmul.mubr.bf16.gmra.mxu0 %v715
  %v1012 = vpop.f32.mrf.mxu0
  %v1013 = vadd.f32 %v900, %v1012
  %v1014 = vpop.f32.mrf.mxu0
  %v1015 = vadd.f32 %v902, %v1014
  %v1016 = vpop.f32.mrf.mxu0
  %v1017 = vadd.f32 %v904, %v1016
  %v1018 = vpop.f32.mrf.mxu0
  %v1019 = vadd.f32 %v906, %v1018
  %1020 = vmatprep.mubr.bf16.mxu0 0
  %1021 = vmatmul.mubr.bf16.gmra.mxu0 %v718
  %v1022 = vpop.f32.mrf.mxu0
  %v1023 = vadd.f32 %v910, %v1022
  %v1024 = vpop.f32.mrf.mxu0
  %v1025 = vadd.f32 %v912, %v1024
  %v1026 = vpop.f32.mrf.mxu0
  %v1027 = vadd.f32 %v914, %v1026
  %v1028 = vpop.f32.mrf.mxu0
  %v1029 = vadd.f32 %v916, %v1028
  %1030 = vmatprep.mubr.bf16.mxu0 0
  %1031 = vmatmul.mubr.bf16.gmra.mxu0 %v721
  %v1032 = vpop.f32.mrf.mxu0
  %v1033 = vadd.f32 %v920, %v1032
  %v1034 = vpop.f32.mrf.mxu0
  %v1035 = vadd.f32 %v922, %v1034
  %v1036 = vpop.f32.mrf.mxu0
  %v1037 = vadd.f32 %v924, %v1036
  %v1038 = vpop.f32.mrf.mxu0
  %v1039 = vadd.f32 %v926, %v1038
  %1040 = vmatprep.mubr.bf16.mxu0 0
  %1041 = vmatmul.mubr.bf16.gmra.mxu0 %v724
  %v1042 = vpop.f32.mrf.mxu0
  %v1043 = vadd.f32 %v930, %v1042
  %v1044 = vpop.f32.mrf.mxu0
  %v1045 = vadd.f32 %v932, %v1044
  %v1046 = vpop.f32.mrf.mxu0
  %v1047 = vadd.f32 %v934, %v1046
  %v1048 = vpop.f32.mrf.mxu0
  %v1049 = vadd.f32 %v936, %v1048
  %1050 = vmatprep.mubr.bf16.mxu0 0
  %1051 = vmatmul.mubr.bf16.gmra.mxu0 %v727
  %v1052 = vpop.f32.mrf.mxu0
  %v1053 = vadd.f32 %v940, %v1052
  %v1054 = vpop.f32.mrf.mxu0
  %v1055 = vadd.f32 %v942, %v1054
  %v1056 = vpop.f32.mrf.mxu0
  %v1057 = vadd.f32 %v944, %v1056
  %v1058 = vpop.f32.mrf.mxu0
  %v1059 = vadd.f32 %v946, %v1058
  %1060 = vmatprep.mubr.bf16.mxu0 0
  %1061 = vmatmul.mubr.bf16.gmra.mxu0 %v730
  %v1062 = vpop.f32.mrf.mxu0
  %v1063 = vadd.f32 %v950, %v1062
  %v1064 = vpop.f32.mrf.mxu0
  %v1065 = vadd.f32 %v952, %v1064
  %v1066 = vpop.f32.mrf.mxu0
  %v1067 = vadd.f32 %v954, %v1066
  %v1068 = vpop.f32.mrf.mxu0
  %v1069 = vadd.f32 %v956, %v1068
  %1070 = vdwg.mxu0
  %v1071 = vmax.f32 %v993, 0.0
  %v1072 = vmax.f32 %v995, 0.0
  %v1073 = vmax.f32 %v997, 0.0
  %v1074 = vmax.f32 %v999, 0.0
  %v1075 = vmax.f32 %v1003, 0.0
  %v1076 = vmax.f32 %v1005, 0.0
  %v1077 = vmax.f32 %v1007, 0.0
  %v1078 = vmax.f32 %v1009, 0.0
  %v1079 = vmax.f32 %v1013, 0.0
  %v1080 = vmax.f32 %v1015, 0.0
  %v1081 = vmax.f32 %v1017, 0.0
  %v1082 = vmax.f32 %v1019, 0.0
  %v1083 = vmax.f32 %v1023, 0.0
  %v1084 = vmax.f32 %v1025, 0.0
  %v1085 = vmax.f32 %v1027, 0.0
  %v1086 = vmax.f32 %v1029, 0.0
  %v1087 = vmax.f32 %v1033, 0.0
  %v1088 = vmax.f32 %v1035, 0.0
  %v1089 = vmax.f32 %v1037, 0.0
  %v1090 = vmax.f32 %v1039, 0.0
  %v1091 = vmax.f32 %v1043, 0.0
  %v1092 = vmax.f32 %v1045, 0.0
  %v1093 = vmax.f32 %v1047, 0.0
  %v1094 = vmax.f32 %v1049, 0.0
  %v1095 = vmax.f32 %v1053, 0.0
  %v1096 = vmax.f32 %v1055, 0.0
  %v1097 = vmax.f32 %v1057, 0.0
  %v1098 = vmax.f32 %v1059, 0.0
  %v1099 = vmax.f32 %v1063, 0.0
  %v1100 = vmax.f32 %v1065, 0.0
  %v1101 = vmax.f32 %v1067, 0.0
  %v1102 = vmax.f32 %v1069, 0.0
  %1103 = vst [vmem:[%s3] sm:$0xff] %v1071
  %1104 = vst.msk [vmem:[%s3 + $0x8] sm:$0xff] %vm707, %v1072
  %1105 = vst [vmem:[%s3 + $0x10] sm:$0xff] %v1073
  %1106 = vst.msk [vmem:[%s3 + $0x18] sm:$0xff] %vm707, %v1074
  %1107 = vst [vmem:[%s3 + $0x20] sm:$0xff] %v1075
  %1108 = vst.msk [vmem:[%s3 + $0x28] sm:$0xff] %vm707, %v1076
  %1109 = vst [vmem:[%s3 + $0x30] sm:$0xff] %v1077
  %1110 = vst.msk [vmem:[%s3 + $0x38] sm:$0xff] %vm707, %v1078
  %1111 = vst [vmem:[%s3 + $0x40] sm:$0xff] %v1079
  %1112 = vst.msk [vmem:[%s3 + $0x48] sm:$0xff] %vm707, %v1080
  %1113 = vst [vmem:[%s3 + $0x50] sm:$0xff] %v1081
  %1114 = vst.msk [vmem:[%s3 + $0x58] sm:$0xff] %vm707, %v1082
  %1115 = vst [vmem:[%s3 + $0x60] sm:$0xff] %v1083
  %1116 = vst.msk [vmem:[%s3 + $0x68] sm:$0xff] %vm707, %v1084
  %1117 = vst [vmem:[%s3 + $0x70] sm:$0xff] %v1085
  %1118 = vst.msk [vmem:[%s3 + $0x78] sm:$0xff] %vm707, %v1086
  %1119 = vst [vmem:[%s3 + $0x80] sm:$0xff] %v1087
  %1120 = vst.msk [vmem:[%s3 + $0x88] sm:$0xff] %vm707, %v1088
  %1121 = vst [vmem:[%s3 + $0x90] sm:$0xff] %v1089
  %1122 = vst.msk [vmem:[%s3 + $0x98] sm:$0xff] %vm707, %v1090
  %1123 = vst [vmem:[%s3 + $0xa0] sm:$0xff] %v1091
  %1124 = vst.msk [vmem:[%s3 + $0xa8] sm:$0xff] %vm707, %v1092
  %1125 = vst [vmem:[%s3 + $0xb0] sm:$0xff] %v1093
  %1126 = vst.msk [vmem:[%s3 + $0xb8] sm:$0xff] %vm707, %v1094
  %1127 = vst [vmem:[%s3 + $0xc0] sm:$0xff] %v1095
  %1128 = vst.msk [vmem:[%s3 + $0xc8] sm:$0xff] %vm707, %v1096
  %1129 = vst [vmem:[%s3 + $0xd0] sm:$0xff] %v1097
  %1130 = vst.msk [vmem:[%s3 + $0xd8] sm:$0xff] %vm707, %v1098
  %1131 = vst [vmem:[%s3 + $0xe0] sm:$0xff] %v1099
  %1132 = vst.msk [vmem:[%s3 + $0xe8] sm:$0xff] %vm707, %v1100
  %1133 = vst [vmem:[%s3 + $0xf0] sm:$0xff] %v1101
  %1134 = vst.msk [vmem:[%s3 + $0xf8] sm:$0xff] %vm707, %v1102
  // Predicated region
  $region14: #{inception_c_forward.15} parent=0 // pred_check
    _
  $region15: #{inception_c_forward.15} parent=0 // pred_check_branch
    %1136 = sbr.rel (0) target = $region17
  $region16: #{inception_c_forward.15} parent=0 // pred_region
    _
  $region17: #{inception_c_forward.15} parent=0 // pred_fallthru
    _
  // Predicated region
  $region18: #{inception_c_forward.15} parent=0 // pred_check
    _
  $region19: #{inception_c_forward.15} parent=0 // pred_check_branch
    %1138 = sbr.rel (0) target = $region21
  $region20: #{inception_c_forward.15} parent=0 // pred_region
    _
  $region21: #{inception_c_forward.15} parent=0 // pred_fallthru
    _

// kernel: inception_c_forward.11
$region0: #{inception_c_forward.11}
  #allocation0 [shape = 'u32[]', space=smem, size = 0x4, offset = 0x4, fixed_abs, tag = 'smem constant byte address 0x4 - core index']
  #allocation1 [shape = 'u32[144,128]{1,0:T(1,128)}', space=vmem, size = 0x12000, scoped, tag = 'internal scratch']
  %s0 = inlined_call_operand.vmem [shape: bf16[128,224], index: 0, kind: input, shape index: {}]
  %s1 = inlined_call_operand.vmem [shape: bf16[224,32], index: 1, kind: input, shape index: {}]
  %s2 = inlined_call_operand.vmem [shape: f32[1,32], index: 2, kind: input, shape index: {}]
  %s3 = inlined_call_operand.vmem [shape: f32[128,32], index: 3, kind: output, shape index: {}]
  %s4 = sld [smem:[#allocation0]]
  $region22: #{inception_c_forward.11} parent=0
    _
  %s6 = ssub.s32 1, %s4
  %s7 = scalar_select 0, %s6, %s4
  // Predicated region
  $region2: #{inception_c_forward.11} parent=0 // pred_check
    _
  $region3: #{inception_c_forward.11} parent=0 // pred_check_branch
    %9 = sbr.rel (0) target = $region5
  $region4: #{inception_c_forward.11} parent=0 // pred_region
    _
  $region5: #{inception_c_forward.11} parent=0 // pred_fallthru
    _
  // Predicated region
  $region6: #{inception_c_forward.11} parent=0 // pred_check
    _
  $region7: #{inception_c_forward.11} parent=0 // pred_check_branch
    %11 = sbr.rel (0) target = $region9
  $region8: #{inception_c_forward.11} parent=0 // pred_region
    _
  $region9: #{inception_c_forward.11} parent=0 // pred_fallthru
    _
  // Predicated region
  $region10: #{inception_c_forward.11} parent=0 // pred_check
    _
  $region11: #{inception_c_forward.11} parent=0 // pred_check_branch
    %13 = sbr.rel (0) target = $region13
  $region12: #{inception_c_forward.11} parent=0 // pred_region
    _
  $region13: #{inception_c_forward.11} parent=0 // pred_fallthru
    _
  %v15 = vld [vmem:[%s0] sm:$0xff]
  %v16 = vld [vmem:[%s0 + $0x8] sm:$0xff]
  %v17 = vld [vmem:[%s0 + $0x10] sm:$0xff]
  %v18 = vld [vmem:[%s0 + $0x18] sm:$0xff]
  %v19 = vld [vmem:[%s0 + $0x20] sm:$0xff]
  %v20 = vld [vmem:[%s0 + $0x28] sm:$0xff]
  %v21 = vld [vmem:[%s0 + $0x30] sm:$0xff]
  %v22 = vld [vmem:[%s0 + $0x38] sm:$0xff]
  %v23 = vld [vmem:[%s0 + $0x40] sm:$0xff]
  %v24 = vld [vmem:[%s0 + $0x48] sm:$0xff]
  %v25 = vld [vmem:[%s0 + $0x50] sm:$0xff]
  %v26 = vld [vmem:[%s0 + $0x58] sm:$0xff]
  %v27 = vld [vmem:[%s0 + $0x60] sm:$0xff]
  %v28 = vld [vmem:[%s0 + $0x68] sm:$0xff]
  %v29 = vld [vmem:[%s0 + $0x70] sm:$0xff]
  %v30 = vld [vmem:[%s0 + $0x78] sm:$0xff]
  %v31 = vld [vmem:[%s1] sm:$0xf]
  %v32 = vld [vmem:[%s1 + $0x4] sm:$0xf]
  %v33 = vld [vmem:[%s1 + $0x8] sm:$0xf]
  %v34 = vld [vmem:[%s1 + $0xc] sm:$0xf]
  %v35 = vld [vmem:[%s1 + $0x10] sm:$0xf]
  %v36 = vld [vmem:[%s1 + $0x14] sm:$0xf]
  %v37 = vld [vmem:[%s1 + $0x18] sm:$0xf]
  %v38 = vld [vmem:[%s1 + $0x1c] sm:$0xf]
  %v39 = vld [vmem:[%s1 + $0x20] sm:$0xf]
  %v40 = vld [vmem:[%s1 + $0x24] sm:$0xf]
  %v41 = vld [vmem:[%s1 + $0x28] sm:$0xf]
  %v42 = vld [vmem:[%s1 + $0x2c] sm:$0xf]
  %v43 = vld [vmem:[%s1 + $0x30] sm:$0xf]
  %v44 = vld [vmem:[%s1 + $0x34] sm:$0xf]
  %v45 = vld [vmem:[%s1 + $0x38] sm:$0xf]
  %v46 = vld [vmem:[%s1 + $0x3c] sm:$0xf]
  %v47 = vld [vmem:[%s1 + $0x40] sm:$0xf]
  %v48 = vld [vmem:[%s1 + $0x44] sm:$0xf]
  %v49 = vld [vmem:[%s1 + $0x48] sm:$0xf]
  %v50 = vld [vmem:[%s1 + $0x4c] sm:$0xf]
  %v51 = vld [vmem:[%s1 + $0x50] sm:$0xf]
  %v52 = vld [vmem:[%s1 + $0x54] sm:$0xf]
  %v53 = vld [vmem:[%s1 + $0x58] sm:$0xf]
  %v54 = vld [vmem:[%s1 + $0x5c] sm:$0xf]
  %v55 = vld [vmem:[%s1 + $0x60] sm:$0xf]
  %v56 = vld [vmem:[%s1 + $0x64] sm:$0xf]
  %v57 = vld [vmem:[%s1 + $0x68] sm:$0xf]
  %v58 = vld [vmem:[%s1 + $0x6c] sm:$0xf]
  %v59 = vld [vmem:[%s2] sm:$0x1]
  %v61 = vlaneseq
  %v62 = vshrl.u32 %v61, 7
  %v63 = vsub.s32 0, %v62
  %v64 = vrot.slane %v59, %v63
  %v82 = vunpack.c.l.b16 %v15
  %v83 = vunpack.c.h.b16 %v15
  %v84 = vunpack.c.l.b16 %v16
  %v85 = vunpack.c.h.b16 %v16
  %v86 = vunpack.c.l.b16 %v17
  %v87 = vunpack.c.h.b16 %v17
  %v88 = vunpack.c.l.b16 %v18
  %v89 = vunpack.c.h.b16 %v18
  %v90 = vunpack.c.l.b16 %v19
  %v91 = vunpack.c.h.b16 %v19
  %v92 = vunpack.c.l.b16 %v20
  %v93 = vunpack.c.h.b16 %v20
  %v94 = vunpack.c.l.b16 %v21
  %v95 = vunpack.c.h.b16 %v21
  %v96 = vunpack.c.l.b16 %v22
  %v97 = vunpack.c.h.b16 %v22
  %v98 = vunpack.c.l.b16 %v23
  %v99 = vunpack.c.h.b16 %v23
  %v100 = vunpack.c.l.b16 %v24
  %v101 = vunpack.c.h.b16 %v24
  %v102 = vunpack.c.l.b16 %v25
  %v103 = vunpack.c.h.b16 %v25
  %v104 = vunpack.c.l.b16 %v26
  %v105 = vunpack.c.h.b16 %v26
  %v106 = vunpack.c.l.b16 %v27
  %v107 = vunpack.c.h.b16 %v27
  %v108 = vunpack.c.l.b16 %v28
  %v109 = vunpack.c.h.b16 %v28
  %v110 = vunpack.c.l.b16 %v29
  %v111 = vunpack.c.h.b16 %v29
  %v112 = vunpack.c.l.b16 %v30
  %v113 = vunpack.c.h.b16 %v30
  %v114 = vpack.c.b16 %v84, %v82
  %v115 = vpack.c.b16 %v85, %v83
  %v116 = vpack.c.b16 %v88, %v86
  %v117 = vpack.c.b16 %v89, %v87
  %v118 = vpack.c.b16 %v92, %v90
  %v119 = vpack.c.b16 %v93, %v91
  %v120 = vpack.c.b16 %v96, %v94
  %v121 = vpack.c.b16 %v97, %v95
  %v122 = vpack.c.b16 %v100, %v98
  %v123 = vpack.c.b16 %v101, %v99
  %v124 = vpack.c.b16 %v104, %v102
  %v125 = vpack.c.b16 %v105, %v103
  %v126 = vpack.c.b16 %v108, %v106
  %v127 = vpack.c.b16 %v109, %v107
  %v128 = vpack.c.b16 %v112, %v110
  %v129 = vpack.c.b16 %v113, %v111
  %v166 = vunpack.c.l.b16 %v31
  %v167 = vunpack.c.l.b16 %v32
  %v168 = vunpack.c.l.b16 %v33
  %v169 = vunpack.c.l.b16 %v34
  %v170 = vunpack.c.l.b16 %v35
  %v171 = vunpack.c.l.b16 %v36
  %v172 = vunpack.c.l.b16 %v37
  %v173 = vunpack.c.l.b16 %v38
  %v174 = vunpack.c.l.b16 %v39
  %v175 = vunpack.c.l.b16 %v40
  %v176 = vunpack.c.l.b16 %v41
  %v177 = vunpack.c.l.b16 %v42
  %v178 = vunpack.c.l.b16 %v43
  %v179 = vunpack.c.l.b16 %v44
  %v180 = vunpack.c.l.b16 %v45
  %v181 = vunpack.c.l.b16 %v46
  %v182 = vunpack.c.l.b16 %v47
  %v183 = vunpack.c.l.b16 %v48
  %v184 = vunpack.c.l.b16 %v49
  %v185 = vunpack.c.l.b16 %v50
  %v186 = vunpack.c.l.b16 %v51
  %v187 = vunpack.c.l.b16 %v52
  %v188 = vunpack.c.l.b16 %v53
  %v189 = vunpack.c.l.b16 %v54
  %v190 = vunpack.c.l.b16 %v55
  %v191 = vunpack.c.l.b16 %v56
  %v192 = vunpack.c.l.b16 %v57
  %v193 = vunpack.c.l.b16 %v58
  %v194 = vpack.c.b16 %v167, %v166
  %v195 = vpack.c.b16 %v169, %v168
  %v196 = vpack.c.b16 %v171, %v170
  %v197 = vpack.c.b16 %v173, %v172
  %v198 = vpack.c.b16 %v175, %v174
  %v199 = vpack.c.b16 %v177, %v176
  %v200 = vpack.c.b16 %v179, %v178
  %v201 = vpack.c.b16 %v181, %v180
  %v202 = vpack.c.b16 %v183, %v182
  %v203 = vpack.c.b16 %v185, %v184
  %v204 = vpack.c.b16 %v187, %v186
  %v205 = vpack.c.b16 %v189, %v188
  %v206 = vpack.c.b16 %v191, %v190
  %v207 = vpack.c.b16 %v193, %v192
  %vm222 = vcmask 785408
  %v224 = vsel %vm222, %v115, 0
  %v227 = vsel %vm222, %v117, 0
  %v230 = vsel %vm222, %v119, 0
  %v233 = vsel %vm222, %v121, 0
  %v236 = vsel %vm222, %v123, 0
  %v239 = vsel %vm222, %v125, 0
  %v242 = vsel %vm222, %v127, 0
  %v245 = vsel %vm222, %v129, 0
  %247 = vmatprep.subr.bf16.mxu0 0
  %248 = vmatpush1.bf16.msra.mxu0 %v201
  %249 = vmatprep.subr.bf16.mxu0 0
  %250 = vmatpush1.bf16.msra.mxu0 %v200
  %251 = vmatprep.subr.bf16.mxu0 0
  %252 = vmatpush1.bf16.msra.mxu0 %v199
  %253 = vmatprep.subr.bf16.mxu0 0
  %254 = vmatpush1.bf16.msra.mxu0 %v198
  %255 = vmatprep.subr.bf16.mxu0 0
  %256 = vmatpush1.bf16.msra.mxu0 %v197
  %257 = vmatprep.subr.bf16.mxu0 0
  %258 = vmatpush1.bf16.msra.mxu0 %v196
  %259 = vmatprep.subr.bf16.mxu0 0
  %260 = vmatpush1.bf16.msra.mxu0 %v195
  %261 = vmatprep.subr.bf16.mxu0 0
  %262 = vmatpush1.bf16.msra.mxu0 %v194
  %263 = vmatprep.subr.bf16.mxu0 0
  %264 = vmatpush2.bf16.msra.mxu0 0
  %265 = vmatprep.subr.bf16.mxu0 0
  %266 = vmatpush2.bf16.msra.mxu0 0
  %267 = vmatprep.subr.bf16.mxu0 0
  %268 = vmatpush2.bf16.msra.mxu0 %v207
  %269 = vmatprep.subr.bf16.mxu0 0
  %270 = vmatpush2.bf16.msra.mxu0 %v206
  %271 = vmatprep.subr.bf16.mxu0 0
  %272 = vmatpush2.bf16.msra.mxu0 %v205
  %273 = vmatprep.subr.bf16.mxu0 0
  %274 = vmatpush2.bf16.msra.mxu0 %v204
  %275 = vmatprep.subr.bf16.mxu0 0
  %276 = vmatpush2.bf16.msra.mxu0 %v203
  %277 = vmatprep.subr.bf16.mxu0 0
  %278 = vmatpush2.bf16.msra.mxu0 %v202
  %279 = vmatprep.mubr.bf16.mxu0 %v224
  %280 = vmatmul.mubr.bf16.gmra.mxu0 %v114
  %v281 = vpop.f32.mrf.mxu0
  %v282 = vadd.f32 %v64, %v281
  %v283 = vpop.f32.mrf.mxu0
  %v284 = vpop.f32.mrf.mxu0
  %v285 = vadd.f32 %v64, %v284
  %v286 = vpop.f32.mrf.mxu0
  %287 = vmatprep.mubr.bf16.mxu0 %v227
  %288 = vmatmul.mubr.bf16.gmra.mxu0 %v116
  %v289 = vpop.f32.mrf.mxu0
  %v290 = vadd.f32 %v64, %v289
  %v291 = vpop.f32.mrf.mxu0
  %v292 = vpop.f32.mrf.mxu0
  %v293 = vadd.f32 %v64, %v292
  %v294 = vpop.f32.mrf.mxu0
  %295 = vmatprep.mubr.bf16.mxu0 %v230
  %296 = vmatmul.mubr.bf16.gmra.mxu0 %v118
  %v297 = vpop.f32.mrf.mxu0
  %v298 = vadd.f32 %v64, %v297
  %v299 = vpop.f32.mrf.mxu0
  %v300 = vpop.f32.mrf.mxu0
  %v301 = vadd.f32 %v64, %v300
  %v302 = vpop.f32.mrf.mxu0
  %303 = vmatprep.mubr.bf16.mxu0 %v233
  %304 = vmatmul.mubr.bf16.gmra.mxu0 %v120
  %v305 = vpop.f32.mrf.mxu0
  %v306 = vadd.f32 %v64, %v305
  %v307 = vpop.f32.mrf.mxu0
  %v308 = vpop.f32.mrf.mxu0
  %v309 = vadd.f32 %v64, %v308
  %v310 = vpop.f32.mrf.mxu0
  %311 = vmatprep.mubr.bf16.mxu0 %v236
  %312 = vmatmul.mubr.bf16.gmra.mxu0 %v122
  %v313 = vpop.f32.mrf.mxu0
  %v314 = vadd.f32 %v64, %v313
  %v315 = vpop.f32.mrf.mxu0
  %v316 = vpop.f32.mrf.mxu0
  %v317 = vadd.f32 %v64, %v316
  %v318 = vpop.f32.mrf.mxu0
  %319 = vmatprep.mubr.bf16.mxu0 %v239
  %320 = vmatmul.mubr.bf16.gmra.mxu0 %v124
  %v321 = vpop.f32.mrf.mxu0
  %v322 = vadd.f32 %v64, %v321
  %v323 = vpop.f32.mrf.mxu0
  %v324 = vpop.f32.mrf.mxu0
  %v325 = vadd.f32 %v64, %v324
  %v326 = vpop.f32.mrf.mxu0
  %327 = vmatprep.mubr.bf16.mxu0 %v242
  %328 = vmatmul.mubr.bf16.gmra.mxu0 %v126
  %v329 = vpop.f32.mrf.mxu0
  %v330 = vadd.f32 %v64, %v329
  %v331 = vpop.f32.mrf.mxu0
  %v332 = vpop.f32.mrf.mxu0
  %v333 = vadd.f32 %v64, %v332
  %v334 = vpop.f32.mrf.mxu0
  %335 = vmatprep.mubr.bf16.mxu0 %v245
  %336 = vmatmul.mubr.bf16.gmra.mxu0 %v128
  %v337 = vpop.f32.mrf.mxu0
  %v338 = vadd.f32 %v64, %v337
  %v339 = vpop.f32.mrf.mxu0
  %v340 = vpop.f32.mrf.mxu0
  %v341 = vadd.f32 %v64, %v340
  %v342 = vpop.f32.mrf.mxu0
  %343 = vdwg.mxu0
  %v344 = vmax.f32 %v282, 0.0
  %v345 = vmax.f32 %v285, 0.0
  %v346 = vmax.f32 %v290, 0.0
  %v347 = vmax.f32 %v293, 0.0
  %v348 = vmax.f32 %v298, 0.0
  %v349 = vmax.f32 %v301, 0.0
  %v350 = vmax.f32 %v306, 0.0
  %v351 = vmax.f32 %v309, 0.0
  %v352 = vmax.f32 %v314, 0.0
  %v353 = vmax.f32 %v317, 0.0
  %v354 = vmax.f32 %v322, 0.0
  %v355 = vmax.f32 %v325, 0.0
  %v356 = vmax.f32 %v330, 0.0
  %v357 = vmax.f32 %v333, 0.0
  %v358 = vmax.f32 %v338, 0.0
  %v359 = vmax.f32 %v341, 0.0
  %vm360 = vcmask 261120
  %361 = vst.msk [vmem:[%s3] sm:$0xff] %vm360, %v344
  %362 = vst.msk [vmem:[%s3 + $0x8] sm:$0xff] %vm360, %v345
  %363 = vst.msk [vmem:[%s3 + $0x10] sm:$0xff] %vm360, %v346
  %364 = vst.msk [vmem:[%s3 + $0x18] sm:$0xff] %vm360, %v347
  %365 = vst.msk [vmem:[%s3 + $0x20] sm:$0xff] %vm360, %v348
  %366 = vst.msk [vmem:[%s3 + $0x28] sm:$0xff] %vm360, %v349
  %367 = vst.msk [vmem:[%s3 + $0x30] sm:$0xff] %vm360, %v350
  %368 = vst.msk [vmem:[%s3 + $0x38] sm:$0xff] %vm360, %v351
  %369 = vst.msk [vmem:[%s3 + $0x40] sm:$0xff] %vm360, %v352
  %370 = vst.msk [vmem:[%s3 + $0x48] sm:$0xff] %vm360, %v353
  %371 = vst.msk [vmem:[%s3 + $0x50] sm:$0xff] %vm360, %v354
  %372 = vst.msk [vmem:[%s3 + $0x58] sm:$0xff] %vm360, %v355
  %373 = vst.msk [vmem:[%s3 + $0x60] sm:$0xff] %vm360, %v356
  %374 = vst.msk [vmem:[%s3 + $0x68] sm:$0xff] %vm360, %v357
  %375 = vst.msk [vmem:[%s3 + $0x70] sm:$0xff] %vm360, %v358
  %376 = vst.msk [vmem:[%s3 + $0x78] sm:$0xff] %vm360, %v359
  // Predicated region
  $region14: #{inception_c_forward.11} parent=0 // pred_check
    _
  $region15: #{inception_c_forward.11} parent=0 // pred_check_branch
    %378 = sbr.rel (0) target = $region17
  $region16: #{inception_c_forward.11} parent=0 // pred_region
    _
  $region17: #{inception_c_forward.11} parent=0 // pred_fallthru
    _
  // Predicated region
  $region18: #{inception_c_forward.11} parent=0 // pred_check
    _
  $region19: #{inception_c_forward.11} parent=0 // pred_check_branch
    %380 = sbr.rel (0) target = $region21
  $region20: #{inception_c_forward.11} parent=0 // pred_region
    _
  $region21: #{inception_c_forward.11} parent=0 // pred_fallthru
    _

// kernel: inception_c_forward.14
$region0: #{inception_c_forward.14}
  #allocation0 [shape = 'u32[]', space=smem, size = 0x4, offset = 0x4, fixed_abs, tag = 'smem constant byte address 0x4 - core index']
  #allocation1 [shape = 'u32[144,128]{1,0:T(1,128)}', space=vmem, size = 0x12000, scoped, tag = 'internal scratch']
  %s0 = inlined_call_operand.vmem [shape: bf16[128,224], index: 0, kind: input, shape index: {}]
  %s1 = inlined_call_operand.vmem [shape: bf16[224,192], index: 1, kind: input, shape index: {}]
  %s2 = inlined_call_operand.vmem [shape: f32[1,192], index: 2, kind: input, shape index: {}]
  %s3 = inlined_call_operand.vmem [shape: f32[128,192], index: 3, kind: output, shape index: {}]
  %s4 = sld [smem:[#allocation0]]
  $region22: #{inception_c_forward.14} parent=0
    _
  %s6 = ssub.s32 1, %s4
  %s7 = scalar_select 0, %s6, %s4
  // Predicated region
  $region2: #{inception_c_forward.14} parent=0 // pred_check
    _
  $region3: #{inception_c_forward.14} parent=0 // pred_check_branch
    %9 = sbr.rel (0) target = $region5
  $region4: #{inception_c_forward.14} parent=0 // pred_region
    _
  $region5: #{inception_c_forward.14} parent=0 // pred_fallthru
    _
  // Predicated region
  $region6: #{inception_c_forward.14} parent=0 // pred_check
    _
  $region7: #{inception_c_forward.14} parent=0 // pred_check_branch
    %11 = sbr.rel (0) target = $region9
  $region8: #{inception_c_forward.14} parent=0 // pred_region
    _
  $region9: #{inception_c_forward.14} parent=0 // pred_fallthru
    _
  // Predicated region
  $region10: #{inception_c_forward.14} parent=0 // pred_check
    _
  $region11: #{inception_c_forward.14} parent=0 // pred_check_branch
    %13 = sbr.rel (0) target = $region13
  $region12: #{inception_c_forward.14} parent=0 // pred_region
    _
  $region13: #{inception_c_forward.14} parent=0 // pred_fallthru
    _
  %v15 = vld [vmem:[%s0] sm:$0xff]
  %v16 = vld [vmem:[%s0 + $0x8] sm:$0xff]
  %v17 = vld [vmem:[%s0 + $0x10] sm:$0xff]
  %v18 = vld [vmem:[%s0 + $0x18] sm:$0xff]
  %v19 = vld [vmem:[%s0 + $0x20] sm:$0xff]
  %v20 = vld [vmem:[%s0 + $0x28] sm:$0xff]
  %v21 = vld [vmem:[%s0 + $0x30] sm:$0xff]
  %v22 = vld [vmem:[%s0 + $0x38] sm:$0xff]
  %v23 = vld [vmem:[%s0 + $0x40] sm:$0xff]
  %v24 = vld [vmem:[%s0 + $0x48] sm:$0xff]
  %v25 = vld [vmem:[%s0 + $0x50] sm:$0xff]
  %v26 = vld [vmem:[%s0 + $0x58] sm:$0xff]
  %v27 = vld [vmem:[%s0 + $0x60] sm:$0xff]
  %v28 = vld [vmem:[%s0 + $0x68] sm:$0xff]
  %v29 = vld [vmem:[%s0 + $0x70] sm:$0xff]
  %v30 = vld [vmem:[%s0 + $0x78] sm:$0xff]
  %v31 = vld [vmem:[%s1] sm:$0xff]
  %v32 = vld [vmem:[%s1 + $0x8] sm:$0xff]
  %v33 = vld [vmem:[%s1 + $0x10] sm:$0xff]
  %v34 = vld [vmem:[%s1 + $0x18] sm:$0xff]
  %v35 = vld [vmem:[%s1 + $0x20] sm:$0xff]
  %v36 = vld [vmem:[%s1 + $0x28] sm:$0xff]
  %v37 = vld [vmem:[%s1 + $0x30] sm:$0xff]
  %v38 = vld [vmem:[%s1 + $0x38] sm:$0xff]
  %v39 = vld [vmem:[%s1 + $0x40] sm:$0xff]
  %v40 = vld [vmem:[%s1 + $0x48] sm:$0xff]
  %v41 = vld [vmem:[%s1 + $0x50] sm:$0xff]
  %v42 = vld [vmem:[%s1 + $0x58] sm:$0xff]
  %v43 = vld [vmem:[%s1 + $0x60] sm:$0xff]
  %v44 = vld [vmem:[%s1 + $0x68] sm:$0xff]
  %v45 = vld [vmem:[%s1 + $0x70] sm:$0xff]
  %v46 = vld [vmem:[%s1 + $0x78] sm:$0xff]
  %v47 = vld [vmem:[%s1 + $0x80] sm:$0xff]
  %v48 = vld [vmem:[%s1 + $0x88] sm:$0xff]
  %v49 = vld [vmem:[%s1 + $0x90] sm:$0xff]
  %v50 = vld [vmem:[%s1 + $0x98] sm:$0xff]
  %v51 = vld [vmem:[%s1 + $0xa0] sm:$0xff]
  %v52 = vld [vmem:[%s1 + $0xa8] sm:$0xff]
  %v53 = vld [vmem:[%s1 + $0xb0] sm:$0xff]
  %v54 = vld [vmem:[%s1 + $0xb8] sm:$0xff]
  %v55 = vld [vmem:[%s1 + $0xc0] sm:$0xff]
  %v56 = vld [vmem:[%s1 + $0xc8] sm:$0xff]
  %v57 = vld [vmem:[%s1 + $0xd0] sm:$0xff]
  %v58 = vld [vmem:[%s1 + $0xd8] sm:$0xff]
  %v59 = vld [vmem:[%s2] sm:$0x3]
  %v61 = vlaneseq
  %v62 = vshrl.u32 %v61, 7
  %v63 = vsub.s32 0, %v62
  %v64 = vrot.slane %v59, %v63
  %v65 = vlaneseq
  %v66 = vshrl.u32 %v65, 7
  %v67 = vsub.s32 1, %v66
  %v68 = vrot.slane %v59, %v67
  %v87 = vunpack.c.l.b16 %v15
  %v88 = vunpack.c.h.b16 %v15
  %v89 = vunpack.c.l.b16 %v16
  %v90 = vunpack.c.h.b16 %v16
  %v91 = vunpack.c.l.b16 %v17
  %v92 = vunpack.c.h.b16 %v17
  %v93 = vunpack.c.l.b16 %v18
  %v94 = vunpack.c.h.b16 %v18
  %v95 = vunpack.c.l.b16 %v19
  %v96 = vunpack.c.h.b16 %v19
  %v97 = vunpack.c.l.b16 %v20
  %v98 = vunpack.c.h.b16 %v20
  %v99 = vunpack.c.l.b16 %v21
  %v100 = vunpack.c.h.b16 %v21
  %v101 = vunpack.c.l.b16 %v22
  %v102 = vunpack.c.h.b16 %v22
  %v103 = vunpack.c.l.b16 %v23
  %v104 = vunpack.c.h.b16 %v23
  %v105 = vunpack.c.l.b16 %v24
  %v106 = vunpack.c.h.b16 %v24
  %v107 = vunpack.c.l.b16 %v25
  %v108 = vunpack.c.h.b16 %v25
  %v109 = vunpack.c.l.b16 %v26
  %v110 = vunpack.c.h.b16 %v26
  %v111 = vunpack.c.l.b16 %v27
  %v112 = vunpack.c.h.b16 %v27
  %v113 = vunpack.c.l.b16 %v28
  %v114 = vunpack.c.h.b16 %v28
  %v115 = vunpack.c.l.b16 %v29
  %v116 = vunpack.c.h.b16 %v29
  %v117 = vunpack.c.l.b16 %v30
  %v118 = vunpack.c.h.b16 %v30
  %v119 = vpack.c.b16 %v89, %v87
  %v120 = vpack.c.b16 %v90, %v88
  %v121 = vpack.c.b16 %v93, %v91
  %v122 = vpack.c.b16 %v94, %v92
  %v123 = vpack.c.b16 %v97, %v95
  %v124 = vpack.c.b16 %v98, %v96
  %v125 = vpack.c.b16 %v101, %v99
  %v126 = vpack.c.b16 %v102, %v100
  %v127 = vpack.c.b16 %v105, %v103
  %v128 = vpack.c.b16 %v106, %v104
  %v129 = vpack.c.b16 %v109, %v107
  %v130 = vpack.c.b16 %v110, %v108
  %v131 = vpack.c.b16 %v113, %v111
  %v132 = vpack.c.b16 %v114, %v112
  %v133 = vpack.c.b16 %v117, %v115
  %v134 = vpack.c.b16 %v118, %v116
  %v171 = vunpack.c.l.b16 %v31
  %v172 = vunpack.c.h.b16 %v31
  %v173 = vunpack.c.l.b16 %v32
  %v174 = vunpack.c.h.b16 %v32
  %v175 = vunpack.c.l.b16 %v33
  %v176 = vunpack.c.h.b16 %v33
  %v177 = vunpack.c.l.b16 %v34
  %v178 = vunpack.c.h.b16 %v34
  %v179 = vunpack.c.l.b16 %v35
  %v180 = vunpack.c.h.b16 %v35
  %v181 = vunpack.c.l.b16 %v36
  %v182 = vunpack.c.h.b16 %v36
  %v183 = vunpack.c.l.b16 %v37
  %v184 = vunpack.c.h.b16 %v37
  %v185 = vunpack.c.l.b16 %v38
  %v186 = vunpack.c.h.b16 %v38
  %v187 = vunpack.c.l.b16 %v39
  %v188 = vunpack.c.h.b16 %v39
  %v189 = vunpack.c.l.b16 %v40
  %v190 = vunpack.c.h.b16 %v40
  %v191 = vunpack.c.l.b16 %v41
  %v192 = vunpack.c.h.b16 %v41
  %v193 = vunpack.c.l.b16 %v42
  %v194 = vunpack.c.h.b16 %v42
  %v195 = vunpack.c.l.b16 %v43
  %v196 = vunpack.c.h.b16 %v43
  %v197 = vunpack.c.l.b16 %v44
  %v198 = vunpack.c.h.b16 %v44
  %v199 = vunpack.c.l.b16 %v45
  %v200 = vunpack.c.h.b16 %v45
  %v201 = vunpack.c.l.b16 %v46
  %v202 = vunpack.c.h.b16 %v46
  %v203 = vunpack.c.l.b16 %v47
  %v204 = vunpack.c.h.b16 %v47
  %v205 = vunpack.c.l.b16 %v48
  %v206 = vunpack.c.h.b16 %v48
  %v207 = vunpack.c.l.b16 %v49
  %v208 = vunpack.c.h.b16 %v49
  %v209 = vunpack.c.l.b16 %v50
  %v210 = vunpack.c.h.b16 %v50
  %v211 = vunpack.c.l.b16 %v51
  %v212 = vunpack.c.h.b16 %v51
  %v213 = vunpack.c.l.b16 %v52
  %v214 = vunpack.c.h.b16 %v52
  %v215 = vunpack.c.l.b16 %v53
  %v216 = vunpack.c.h.b16 %v53
  %v217 = vunpack.c.l.b16 %v54
  %v218 = vunpack.c.h.b16 %v54
  %v219 = vunpack.c.l.b16 %v55
  %v220 = vunpack.c.h.b16 %v55
  %v221 = vunpack.c.l.b16 %v56
  %v222 = vunpack.c.h.b16 %v56
  %v223 = vunpack.c.l.b16 %v57
  %v224 = vunpack.c.h.b16 %v57
  %v225 = vunpack.c.l.b16 %v58
  %v226 = vunpack.c.h.b16 %v58
  %v227 = vpack.c.b16 %v173, %v171
  %v228 = vpack.c.b16 %v174, %v172
  %v229 = vpack.c.b16 %v177, %v175
  %v230 = vpack.c.b16 %v178, %v176
  %v231 = vpack.c.b16 %v181, %v179
  %v232 = vpack.c.b16 %v182, %v180
  %v233 = vpack.c.b16 %v185, %v183
  %v234 = vpack.c.b16 %v186, %v184
  %v235 = vpack.c.b16 %v189, %v187
  %v236 = vpack.c.b16 %v190, %v188
  %v237 = vpack.c.b16 %v193, %v191
  %v238 = vpack.c.b16 %v194, %v192
  %v239 = vpack.c.b16 %v197, %v195
  %v240 = vpack.c.b16 %v198, %v196
  %v241 = vpack.c.b16 %v201, %v199
  %v242 = vpack.c.b16 %v202, %v200
  %v243 = vpack.c.b16 %v205, %v203
  %v244 = vpack.c.b16 %v206, %v204
  %v245 = vpack.c.b16 %v209, %v207
  %v246 = vpack.c.b16 %v210, %v208
  %v247 = vpack.c.b16 %v213, %v211
  %v248 = vpack.c.b16 %v214, %v212
  %v249 = vpack.c.b16 %v217, %v215
  %v250 = vpack.c.b16 %v218, %v216
  %v251 = vpack.c.b16 %v221, %v219
  %v252 = vpack.c.b16 %v222, %v220
  %v253 = vpack.c.b16 %v225, %v223
  %v254 = vpack.c.b16 %v226, %v224
  %vm283 = vcmask 785408
  %v285 = vsel %vm283, %v120, 0
  %v288 = vsel %vm283, %v122, 0
  %v291 = vsel %vm283, %v124, 0
  %v294 = vsel %vm283, %v126, 0
  %v297 = vsel %vm283, %v128, 0
  %v300 = vsel %vm283, %v130, 0
  %v303 = vsel %vm283, %v132, 0
  %v306 = vsel %vm283, %v134, 0
  %308 = vmatprep.subr.bf16.mxu0 %v242
  %309 = vmatpush1.bf16.msra.mxu0 %v241
  %310 = vmatprep.subr.bf16.mxu0 %v240
  %311 = vmatpush1.bf16.msra.mxu0 %v239
  %312 = vmatprep.subr.bf16.mxu0 %v238
  %313 = vmatpush1.bf16.msra.mxu0 %v237
  %314 = vmatprep.subr.bf16.mxu0 %v236
  %315 = vmatpush1.bf16.msra.mxu0 %v235
  %316 = vmatprep.subr.bf16.mxu0 %v234
  %317 = vmatpush1.bf16.msra.mxu0 %v233
  %318 = vmatprep.subr.bf16.mxu0 %v232
  %319 = vmatpush1.bf16.msra.mxu0 %v231
  %320 = vmatprep.subr.bf16.mxu0 %v230
  %321 = vmatpush1.bf16.msra.mxu0 %v229
  %322 = vmatprep.subr.bf16.mxu0 %v228
  %323 = vmatpush1.bf16.msra.mxu0 %v227
  %324 = vmatprep.subr.bf16.mxu0 0
  %325 = vmatpush2.bf16.msra.mxu0 0
  %326 = vmatprep.subr.bf16.mxu0 0
  %327 = vmatpush2.bf16.msra.mxu0 0
  %328 = vmatprep.subr.bf16.mxu0 %v254
  %329 = vmatpush2.bf16.msra.mxu0 %v253
  %330 = vmatprep.subr.bf16.mxu0 %v252
  %331 = vmatpush2.bf16.msra.mxu0 %v251
  %332 = vmatprep.subr.bf16.mxu0 %v250
  %333 = vmatpush2.bf16.msra.mxu0 %v249
  %334 = vmatprep.subr.bf16.mxu0 %v248
  %335 = vmatpush2.bf16.msra.mxu0 %v247
  %336 = vmatprep.subr.bf16.mxu0 %v246
  %337 = vmatpush2.bf16.msra.mxu0 %v245
  %338 = vmatprep.subr.bf16.mxu0 %v244
  %339 = vmatpush2.bf16.msra.mxu0 %v243
  %340 = vmatprep.mubr.bf16.mxu0 %v285
  %341 = vmatmul.mubr.bf16.gmra.mxu0 %v119
  %v342 = vpop.f32.mrf.mxu0
  %v343 = vadd.f32 %v64, %v342
  %v344 = vpop.f32.mrf.mxu0
  %v345 = vadd.f32 %v68, %v344
  %v346 = vpop.f32.mrf.mxu0
  %v347 = vadd.f32 %v64, %v346
  %v348 = vpop.f32.mrf.mxu0
  %v349 = vadd.f32 %v68, %v348
  %350 = vmatprep.mubr.bf16.mxu0 %v288
  %351 = vmatmul.mubr.bf16.gmra.mxu0 %v121
  %v352 = vpop.f32.mrf.mxu0
  %v353 = vadd.f32 %v64, %v352
  %v354 = vpop.f32.mrf.mxu0
  %v355 = vadd.f32 %v68, %v354
  %v356 = vpop.f32.mrf.mxu0
  %v357 = vadd.f32 %v64, %v356
  %v358 = vpop.f32.mrf.mxu0
  %v359 = vadd.f32 %v68, %v358
  %360 = vmatprep.mubr.bf16.mxu0 %v291
  %361 = vmatmul.mubr.bf16.gmra.mxu0 %v123
  %v362 = vpop.f32.mrf.mxu0
  %v363 = vadd.f32 %v64, %v362
  %v364 = vpop.f32.mrf.mxu0
  %v365 = vadd.f32 %v68, %v364
  %v366 = vpop.f32.mrf.mxu0
  %v367 = vadd.f32 %v64, %v366
  %v368 = vpop.f32.mrf.mxu0
  %v369 = vadd.f32 %v68, %v368
  %370 = vmatprep.mubr.bf16.mxu0 %v294
  %371 = vmatmul.mubr.bf16.gmra.mxu0 %v125
  %v372 = vpop.f32.mrf.mxu0
  %v373 = vadd.f32 %v64, %v372
  %v374 = vpop.f32.mrf.mxu0
  %v375 = vadd.f32 %v68, %v374
  %v376 = vpop.f32.mrf.mxu0
  %v377 = vadd.f32 %v64, %v376
  %v378 = vpop.f32.mrf.mxu0
  %v379 = vadd.f32 %v68, %v378
  %380 = vmatprep.mubr.bf16.mxu0 %v297
  %381 = vmatmul.mubr.bf16.gmra.mxu0 %v127
  %v382 = vpop.f32.mrf.mxu0
  %v383 = vadd.f32 %v64, %v382
  %v384 = vpop.f32.mrf.mxu0
  %v385 = vadd.f32 %v68, %v384
  %v386 = vpop.f32.mrf.mxu0
  %v387 = vadd.f32 %v64, %v386
  %v388 = vpop.f32.mrf.mxu0
  %v389 = vadd.f32 %v68, %v388
  %390 = vmatprep.mubr.bf16.mxu0 %v300
  %391 = vmatmul.mubr.bf16.gmra.mxu0 %v129
  %v392 = vpop.f32.mrf.mxu0
  %v393 = vadd.f32 %v64, %v392
  %v394 = vpop.f32.mrf.mxu0
  %v395 = vadd.f32 %v68, %v394
  %v396 = vpop.f32.mrf.mxu0
  %v397 = vadd.f32 %v64, %v396
  %v398 = vpop.f32.mrf.mxu0
  %v399 = vadd.f32 %v68, %v398
  %400 = vmatprep.mubr.bf16.mxu0 %v303
  %401 = vmatmul.mubr.bf16.gmra.mxu0 %v131
  %v402 = vpop.f32.mrf.mxu0
  %v403 = vadd.f32 %v64, %v402
  %v404 = vpop.f32.mrf.mxu0
  %v405 = vadd.f32 %v68, %v404
  %v406 = vpop.f32.mrf.mxu0
  %v407 = vadd.f32 %v64, %v406
  %v408 = vpop.f32.mrf.mxu0
  %v409 = vadd.f32 %v68, %v408
  %410 = vmatprep.mubr.bf16.mxu0 %v306
  %411 = vmatmul.mubr.bf16.gmra.mxu0 %v133
  %v412 = vpop.f32.mrf.mxu0
  %v413 = vadd.f32 %v64, %v412
  %v414 = vpop.f32.mrf.mxu0
  %v415 = vadd.f32 %v68, %v414
  %v416 = vpop.f32.mrf.mxu0
  %v417 = vadd.f32 %v64, %v416
  %v418 = vpop.f32.mrf.mxu0
  %v419 = vadd.f32 %v68, %v418
  %420 = vdwg.mxu0
  %v421 = vmax.f32 %v343, 0.0
  %v422 = vmax.f32 %v345, 0.0
  %v423 = vmax.f32 %v347, 0.0
  %v424 = vmax.f32 %v349, 0.0
  %v425 = vmax.f32 %v353, 0.0
  %v426 = vmax.f32 %v355, 0.0
  %v427 = vmax.f32 %v357, 0.0
  %v428 = vmax.f32 %v359, 0.0
  %v429 = vmax.f32 %v363, 0.0
  %v430 = vmax.f32 %v365, 0.0
  %v431 = vmax.f32 %v367, 0.0
  %v432 = vmax.f32 %v369, 0.0
  %v433 = vmax.f32 %v373, 0.0
  %v434 = vmax.f32 %v375, 0.0
  %v435 = vmax.f32 %v377, 0.0
  %v436 = vmax.f32 %v379, 0.0
  %v437 = vmax.f32 %v383, 0.0
  %v438 = vmax.f32 %v385, 0.0
  %v439 = vmax.f32 %v387, 0.0
  %v440 = vmax.f32 %v389, 0.0
  %v441 = vmax.f32 %v393, 0.0
  %v442 = vmax.f32 %v395, 0.0
  %v443 = vmax.f32 %v397, 0.0
  %v444 = vmax.f32 %v399, 0.0
  %v445 = vmax.f32 %v403, 0.0
  %v446 = vmax.f32 %v405, 0.0
  %v447 = vmax.f32 %v407, 0.0
  %v448 = vmax.f32 %v409, 0.0
  %v449 = vmax.f32 %v413, 0.0
  %v450 = vmax.f32 %v415, 0.0
  %v451 = vmax.f32 %v417, 0.0
  %v452 = vmax.f32 %v419, 0.0
  %453 = vst [vmem:[%s3] sm:$0xff] %v421
  %vm454 = vcmask 523264
  %455 = vst.msk [vmem:[%s3 + $0x8] sm:$0xff] %vm454, %v422
  %456 = vst [vmem:[%s3 + $0x10] sm:$0xff] %v423
  %457 = vst.msk [vmem:[%s3 + $0x18] sm:$0xff] %vm454, %v424
  %458 = vst [vmem:[%s3 + $0x20] sm:$0xff] %v425
  %459 = vst.msk [vmem:[%s3 + $0x28] sm:$0xff] %vm454, %v426
  %460 = vst [vmem:[%s3 + $0x30] sm:$0xff] %v427
  %461 = vst.msk [vmem:[%s3 + $0x38] sm:$0xff] %vm454, %v428
  %462 = vst [vmem:[%s3 + $0x40] sm:$0xff] %v429
  %463 = vst.msk [vmem:[%s3 + $0x48] sm:$0xff] %vm454, %v430
  %464 = vst [vmem:[%s3 + $0x50] sm:$0xff] %v431
  %465 = vst.msk [vmem:[%s3 + $0x58] sm:$0xff] %vm454, %v432
  %466 = vst [vmem:[%s3 + $0x60] sm:$0xff] %v433
  %467 = vst.msk [vmem:[%s3 + $0x68] sm:$0xff] %vm454, %v434
  %468 = vst [vmem:[%s3 + $0x70] sm:$0xff] %v435
  %469 = vst.msk [vmem:[%s3 + $0x78] sm:$0xff] %vm454, %v436
  %470 = vst [vmem:[%s3 + $0x80] sm:$0xff] %v437
  %471 = vst.msk [vmem:[%s3 + $0x88] sm:$0xff] %vm454, %v438
  %472 = vst [vmem:[%s3 + $0x90] sm:$0xff] %v439
  %473 = vst.msk [vmem:[%s3 + $0x98] sm:$0xff] %vm454, %v440
  %474 = vst [vmem:[%s3 + $0xa0] sm:$0xff] %v441
  %475 = vst.msk [vmem:[%s3 + $0xa8] sm:$0xff] %vm454, %v442
  %476 = vst [vmem:[%s3 + $0xb0] sm:$0xff] %v443
  %477 = vst.msk [vmem:[%s3 + $0xb8] sm:$0xff] %vm454, %v444
  %478 = vst [vmem:[%s3 + $0xc0] sm:$0xff] %v445
  %479 = vst.msk [vmem:[%s3 + $0xc8] sm:$0xff] %vm454, %v446
  %480 = vst [vmem:[%s3 + $0xd0] sm:$0xff] %v447
  %481 = vst.msk [vmem:[%s3 + $0xd8] sm:$0xff] %vm454, %v448
  %482 = vst [vmem:[%s3 + $0xe0] sm:$0xff] %v449
  %483 = vst.msk [vmem:[%s3 + $0xe8] sm:$0xff] %vm454, %v450
  %484 = vst [vmem:[%s3 + $0xf0] sm:$0xff] %v451
  %485 = vst.msk [vmem:[%s3 + $0xf8] sm:$0xff] %vm454, %v452
  // Predicated region
  $region14: #{inception_c_forward.14} parent=0 // pred_check
    _
  $region15: #{inception_c_forward.14} parent=0 // pred_check_branch
    %487 = sbr.rel (0) target = $region17
  $region16: #{inception_c_forward.14} parent=0 // pred_region
    _
  $region17: #{inception_c_forward.14} parent=0 // pred_fallthru
    _
  // Predicated region
  $region18: #{inception_c_forward.14} parent=0 // pred_check
    _
  $region19: #{inception_c_forward.14} parent=0 // pred_check_branch
    %489 = sbr.rel (0) target = $region21
  $region20: #{inception_c_forward.14} parent=0 // pred_region
    _
  $region21: #{inception_c_forward.14} parent=0 // pred_fallthru
    _

</llo_original>
